<compile_context>
chip_gen: v5e
topology: v5e:2x2
jax: 0.10.0
libtpu: 0.0.40
codegen_flags: <defaults>
</compile_context>

<pallas_src>
import functools
import math

import jax
import jax.numpy as jnp
from jax import lax
from jax.experimental import pallas as pl
from jax.experimental.pallas import tpu as pltpu


# -----------------------------------------------------------------------------
# Pallas kernel: fused, one-step-skewed 2-layer LSTM recurrence + final fc.
# All operands live in VMEM; h/c state is carried in vregs via fori_loop.
# -----------------------------------------------------------------------------
def lstm_fc_kernel(xg0_ref,             # (T, B_TILE, 4H)  x@Wih0 + b0, time-major
                   whh0_ref,            # (H, 4H)
                   wih1_ref,            # (H, 4H)
                   whh1_ref,            # (H, 4H)
                   b1_ref,              # (1, 4H)          fused b_ih_l1 + b_hh_l1
                   wfc_ref, bfc_ref,    # (H, OUT_PAD), (1, OUT_PAD) lane-padded fc
                   out_ref,             # (B_TILE, OUT_PAD)
                   *, hidden_size, unroll):
    T, B, _ = xg0_ref.shape
    H = hidden_size
    acc_t = jnp.float32

    whh0 = whh0_ref[...]
    wih1 = wih1_ref[...]
    whh1 = whh1_ref[...]
    b1 = b1_ref[...]
    mm_dt = whh0.dtype            # f32 by default, bf16 if requested

    def gates(g, c):
        # Full-width transcendentals (2 EUP ops over the whole (B, 4H) tile),
        # then static lane slices for per-gate extraction (PyTorch order i|f|g|o).
        sig = jax.nn.sigmoid(g)
        th = jnp.tanh(g)
        i_g = sig[:, 0 * H:1 * H]
        f_g = sig[:, 1 * H:2 * H]
        g_g = th[:, 2 * H:3 * H]
        o_g = sig[:, 3 * H:4 * H]
        c_new = f_g * c + i_g * g_g
        h_new = o_g * jnp.tanh(c_new)
        return h_new, c_new

    z = jnp.zeros((B, H), acc_t)

    # prologue: layer-0 step 0 (initial h0 is zero, so the gate input is xg0[0]).
    h0, c0 = gates(xg0_ref[0].astype(acc_t), z)

    # fused recurrence with a one-step skew: iteration t computes
    #   layer-0 step t      (needs h0[t-1], c0[t-1], xg0[t])
    #   layer-1 step t-1    (needs h0[t-1], h1[t-2], c1[t-2])
    # the two matmul+gate chains inside the body are independent -> overlap.
    def step(t, carry):
        h0, c0, h1, c1 = carry
        g0 = xg0_ref[t].astype(acc_t) + jnp.dot(
            h0.astype(mm_dt), whh0, preferred_element_type=acc_t)
        g1 = (jnp.dot(h0.astype(mm_dt), wih1, preferred_element_type=acc_t)
              + jnp.dot(h1.astype(mm_dt), whh1, preferred_element_type=acc_t)
              + b1)
        h0n, c0n = gates(g0, c0)
        h1n, c1n = gates(g1, c1)
        return (h0n, c0n, h1n, c1n)

    h0, c0, h1, c1 = lax.fori_loop(1, T, step, (h0, c0, z, z), unroll=unroll)

    # epilogue: layer-1 step T-1 (consumes the final layer-0 hidden state).
    g1 = (jnp.dot(h0.astype(mm_dt), wih1, preferred_element_type=acc_t)
          + jnp.dot(h1.astype(mm_dt), whh1, preferred_element_type=acc_t)
          + b1)
    h1, _ = gates(g1, c1)

    # fc on the last timestep's layer-1 hidden state (lane-dense padded store).
    out_ref[...] = (jnp.dot(h1.astype(mm_dt), wfc_ref[...],
                            preferred_element_type=acc_t)
                    + bfc_ref[...]).astype(out_ref.dtype)


def _vmem_limit_bytes():
    # Generation-aware VMEM budget: ~75% of physical (≈96 MiB v5e/v6e, ≈48 MiB v7x).
    try:
        cap = int(pltpu.get_tpu_info().vmem_capacity_bytes)
    except Exception:
        cap = 64 * 1024 * 1024
    return max(32 * 1024 * 1024, int(0.75 * cap))


# -----------------------------------------------------------------------------
# Wrapper: padding, hoisted layer-0 projection (time-major), pallas_call.
# -----------------------------------------------------------------------------
def lstm_model_forward(x, params, hidden_size, matmul_dtype=jnp.float32):
    """x: (B, T, I) float32, batch-first (like the PyTorch module)."""
    B, T, I = x.shape
    H = hidden_size
    OUT_PAD = ((I + 127) // 128) * 128          # lane-dense fc output

    # Batch padding: sublane multiple of 8; once the batch is big enough, split it
    # into >= 2 blocks so the "parallel" grid axis shards across v7x's 2 TensorCores.
    B_pad = ((B + 7) // 8) * 8
    B_TILE = B_pad if B_pad <= 8 else ((B_pad // 2 + 7) // 8) * 8
    B_pad = pl.cdiv(B_pad, B_TILE) * B_TILE
    grid = (B_pad // B_TILE,)

    x_pad = jnp.zeros((B_pad, T, I), jnp.float32).at[:B].set(x)

    # Hoist the layer-0 input projection out of the recurrence, producing it
    # DIRECTLY in time-major layout (no separate transpose pass).
    wih0_T = params["w_ih_l0"].T                                   # (I, 4H)
    b0 = (params["b_ih_l0"] + params["b_hh_l0"]).reshape(1, 1, 4 * H)
    xg0_tm = jnp.einsum("bti,ig->tbg", x_pad, wih0_T) + b0         # (T, B_pad, 4H)

    # Recurrent / fc weights (optionally bf16 for the v6e/v7x MXU; biases stay f32).
    whh0_T = params["w_hh_l0"].T.astype(matmul_dtype)              # (H, 4H)
    wih1_T = params["w_ih_l1"].T.astype(matmul_dtype)              # (H, 4H)
    whh1_T = params["w_hh_l1"].T.astype(matmul_dtype)              # (H, 4H)
    b1 = (params["b_ih_l1"] + params["b_hh_l1"]).reshape(1, 4 * H)
    wfc_pad = (jnp.zeros((H, OUT_PAD), jnp.float32)
               .at[:, :I].set(params["w_fc"].T).astype(matmul_dtype))
    bfc_pad = jnp.zeros((1, OUT_PAD), jnp.float32).at[:, :I].set(
        params["b_fc"].reshape(1, I))

    kernel = functools.partial(
        lstm_fc_kernel, hidden_size=H, unroll=max(1, min(T - 1, 8)))

    out = pl.pallas_call(
        kernel,
        out_shape=jax.ShapeDtypeStruct((B_pad, OUT_PAD), jnp.float32),
        grid=grid,
        in_specs=[
            pl.BlockSpec((T, B_TILE, 4 * H), lambda b: (0, b, 0)),   # xg0 (time-major)
            pl.BlockSpec((H, 4 * H), lambda b: (0, 0)),              # Whh0
            pl.BlockSpec((H, 4 * H), lambda b: (0, 0)),              # Wih1
            pl.BlockSpec((H, 4 * H), lambda b: (0, 0)),              # Whh1
            pl.BlockSpec((1, 4 * H), lambda b: (0, 0)),              # b1
            pl.BlockSpec((H, OUT_PAD), lambda b: (0, 0)),            # Wfc
            pl.BlockSpec((1, OUT_PAD), lambda b: (0, 0)),            # bfc
        ],
        out_specs=pl.BlockSpec((B_TILE, OUT_PAD), lambda b: (b, 0)),
        compiler_params=pltpu.CompilerParams(
            dimension_semantics=("parallel",),
            vmem_limit_bytes=_vmem_limit_bytes()),
    )(xg0_tm, whh0_T, wih1_T, whh1_T, b1, wfc_pad, bfc_pad)

    # TODO(synk): for long sequences, stream xg0 with a grid over the leading T axis
    # ("arbitrary" semantics, pipeline_mode=pl.Buffered(2)) carrying h/c in persistent
    # VMEM scratch, so resident VMEM becomes T-independent (matters most on v7x's
    # 64 MiB). Pass matmul_dtype=jnp.bfloat16 for H>=128 on v6e/v7x (relax tolerance).
    return out[:B, :I]


# -----------------------------------------------------------------------------
# Deterministic parameter init (same shapes / uniform(-1/sqrt(H), 1/sqrt(H))
# scheme as PyTorch's nn.LSTM / nn.Linear defaults).
# -----------------------------------------------------------------------------
def init_params(key, input_size, hidden_size):
    I, H = input_size, hidden_size
    bound = 1.0 / math.sqrt(H)
    names_shapes = [
        ("w_ih_l0", (4 * H, I)), ("w_hh_l0", (4 * H, H)),
        ("b_ih_l0", (4 * H,)),   ("b_hh_l0", (4 * H,)),
        ("w_ih_l1", (4 * H, H)), ("w_hh_l1", (4 * H, H)),
        ("b_ih_l1", (4 * H,)),   ("b_hh_l1", (4 * H,)),
        ("w_fc",    (I, H)),     ("b_fc",    (I,)),
    ]
    keys = jax.random.split(key, len(names_shapes))
    return {
        name: jax.random.uniform(k, shape, jnp.float32, -bound, bound)
        for (name, shape), k in zip(names_shapes, keys)
    }


# -----------------------------------------------------------------------------
# Pure-JAX reference (same math) for a correctness check.
# -----------------------------------------------------------------------------
def lstm_model_ref(x, params, hidden_size):
    B, T, I = x.shape
    H = hidden_size

    def cell(x_t, h, c, w_ih, w_hh, b_ih, b_hh):
        g = x_t @ w_ih.T + b_ih + h @ w_hh.T + b_hh
        i_g = jax.nn.sigmoid(g[:, 0 * H:1 * H])
        f_g = jax.nn.sigmoid(g[:, 1 * H:2 * H])
        g_g = jnp.tanh(g[:, 2 * H:3 * H])
        o_g = jax.nn.sigmoid(g[:, 3 * H:4 * H])
        c_new = f_g * c + i_g * g_g
        return o_g * jnp.tanh(c_new), c_new

    h0 = c0 = h1 = c1 = jnp.zeros((B, H), jnp.float32)
    for t in range(T):
        h0, c0 = cell(x[:, t, :], h0, c0, params["w_ih_l0"], params["w_hh_l0"],
                      params["b_ih_l0"], params["b_hh_l0"])
        h1, c1 = cell(h0, h1, c1, params["w_ih_l1"], params["w_hh_l1"],
                      params["b_ih_l1"], params["b_hh_l1"])
    return h1 @ params["w_fc"].T + params["b_fc"]


if __name__ == "__main__":
    B, T, I, H = 2, 8, 4, 32   # batch, seq, input_size, hidden_size

    key = jax.random.PRNGKey(0)
    k_x, k_p = jax.random.split(key)
    x = jax.random.normal(k_x, (B, T, I), jnp.float32)
    params = init_params(k_p, I, H)

    out = lstm_model_forward(x, params, H)
    out = jax.block_until_ready(out)

    ref = lstm_model_ref(x, params, H)
    assert out.shape == (B, I), out.shape
    assert jnp.allclose(out, ref, atol=1e-5, rtol=1e-5), (
        f"max err {jnp.max(jnp.abs(out - ref))}")

    print("KERNEL_OK")
</pallas_src>

<mosaic_0001>
module attributes {stable_mosaic.version = 11 : i64} {
  func.func @lstm_fc_kernel(%arg0: i32, %arg1: memref<8x8x128xf32, #tpu.memory_space<vmem>>, %arg2: memref<32x128xf32, #tpu.memory_space<vmem>>, %arg3: memref<32x128xf32, #tpu.memory_space<vmem>>, %arg4: memref<32x128xf32, #tpu.memory_space<vmem>>, %arg5: memref<1x128xf32, #tpu.memory_space<vmem>>, %arg6: memref<32x128xf32, #tpu.memory_space<vmem>>, %arg7: memref<1x128xf32, #tpu.memory_space<vmem>>, %arg8: memref<8x128xf32, #tpu.memory_space<vmem>>) attributes {dimension_semantics = [#tpu.dimension_semantics<parallel>], iteration_bounds = array<i64: 1>, scalar_prefetch = 0 : i64, scratch_operands = 0 : i64, tpu.core_type = #tpu.core_type<tc>, window_params = [{transform_indices = @transform_0, window_bounds = array<i64: 8, 8, 128>}, {pipeline_mode = #tpu.pipeline_mode<synchronous>, transform_indices = @transform_1, window_bounds = array<i64: 32, 128>}, {pipeline_mode = #tpu.pipeline_mode<synchronous>, transform_indices = @transform_2, window_bounds = array<i64: 32, 128>}, {pipeline_mode = #tpu.pipeline_mode<synchronous>, transform_indices = @transform_3, window_bounds = array<i64: 32, 128>}, {pipeline_mode = #tpu.pipeline_mode<synchronous>, transform_indices = @transform_4, window_bounds = array<i64: 1, 128>}, {pipeline_mode = #tpu.pipeline_mode<synchronous>, transform_indices = @transform_5, window_bounds = array<i64: 32, 128>}, {pipeline_mode = #tpu.pipeline_mode<synchronous>, transform_indices = @transform_6, window_bounds = array<i64: 1, 128>}, {transform_indices = @transform_7, window_bounds = array<i64: 8, 128>}]} {
    %c0 = arith.constant 0 : index
    %c0_0 = arith.constant 0 : index
    %0 = vector.load %arg2[%c0, %c0_0] : memref<32x128xf32, #tpu.memory_space<vmem>>, vector<32x128xf32>
    %c0_1 = arith.constant 0 : index
    %c0_2 = arith.constant 0 : index
    %1 = vector.load %arg3[%c0_1, %c0_2] : memref<32x128xf32, #tpu.memory_space<vmem>>, vector<32x128xf32>
    %c0_3 = arith.constant 0 : index
    %c0_4 = arith.constant 0 : index
    %2 = vector.load %arg4[%c0_3, %c0_4] : memref<32x128xf32, #tpu.memory_space<vmem>>, vector<32x128xf32>
    %c0_5 = arith.constant 0 : index
    %c0_6 = arith.constant 0 : index
    %3 = vector.load %arg5[%c0_5, %c0_6] : memref<1x128xf32, #tpu.memory_space<vmem>>, vector<1x128xf32>
    %cst = arith.constant 0.000000e+00 : f32
    %4 = vector.broadcast %cst : f32 to vector<8x32xf32>
    %c0_7 = arith.constant 0 : index
    %c0_8 = arith.constant 0 : index
    %c0_9 = arith.constant 0 : index
    %5 = vector.load %arg1[%c0_7, %c0_8, %c0_9] : memref<8x8x128xf32, #tpu.memory_space<vmem>>, vector<1x8x128xf32>
    %6 = vector.shape_cast %5 : vector<1x8x128xf32> to vector<8x128xf32>
    %7 = arith.negf %6 : vector<8x128xf32>
    %8 = math.exp %7 : vector<8x128xf32>
    %cst_10 = arith.constant 1.000000e+00 : f32
    %9 = vector.broadcast %cst_10 : f32 to vector<8x128xf32>
    %10 = arith.addf %9, %8 : vector<8x128xf32>
    %11 = arith.divf %9, %10 : vector<8x128xf32>
    %12 = math.tanh %6 : vector<8x128xf32>
    %13 = vector.extract_strided_slice %11 {offsets = [0, 0], sizes = [8, 32], strides = [1, 1]} : vector<8x128xf32> to vector<8x32xf32>
    %14 = vector.extract_strided_slice %11 {offsets = [0, 32], sizes = [8, 32], strides = [1, 1]} : vector<8x128xf32> to vector<8x32xf32>
    %15 = vector.extract_strided_slice %12 {offsets = [0, 64], sizes = [8, 32], strides = [1, 1]} : vector<8x128xf32> to vector<8x32xf32>
    %16 = vector.extract_strided_slice %11 {offsets = [0, 96], sizes = [8, 32], strides = [1, 1]} : vector<8x128xf32> to vector<8x32xf32>
    %17 = arith.mulf %14, %4 : vector<8x32xf32>
    %18 = arith.mulf %13, %15 : vector<8x32xf32>
    %19 = arith.addf %17, %18 : vector<8x32xf32>
    %20 = math.tanh %19 : vector<8x32xf32>
    %21 = arith.mulf %16, %20 : vector<8x32xf32>
    %c1_i32 = arith.constant 1 : i32
    %22 = arith.index_cast %c1_i32 : i32 to index
    %c0_11 = arith.constant 0 : index
    %c0_12 = arith.constant 0 : index
    %23 = vector.load %arg1[%22, %c0_11, %c0_12] : memref<8x8x128xf32, #tpu.memory_space<vmem>>, vector<1x8x128xf32>
    %24 = vector.shape_cast %23 : vector<1x8x128xf32> to vector<8x128xf32>
    %cst_13 = arith.constant dense<0.000000e+00> : vector<8x128xf32>
    %25 = tpu.matmul %21, %0, %cst_13 {dimension_numbers = #tpu.dot_dimension_numbers<[1], [0], [0], [1], [0, 0, 1, 1], [], []>} : vector<8x32xf32>, vector<32x128xf32>, vector<8x128xf32> -> vector<8x128xf32>
    %26 = arith.addf %24, %25 : vector<8x128xf32>
    %cst_14 = arith.constant dense<0.000000e+00> : vector<8x128xf32>
    %27 = tpu.matmul %21, %1, %cst_14 {dimension_numbers = #tpu.dot_dimension_numbers<[1], [0], [0], [1], [0, 0, 1, 1], [], []>} : vector<8x32xf32>, vector<32x128xf32>, vector<8x128xf32> -> vector<8x128xf32>
    %cst_15 = arith.constant dense<0.000000e+00> : vector<8x128xf32>
    %28 = tpu.matmul %4, %2, %cst_15 {dimension_numbers = #tpu.dot_dimension_numbers<[1], [0], [0], [1], [0, 0, 1, 1], [], []>} : vector<8x32xf32>, vector<32x128xf32>, vector<8x128xf32> -> vector<8x128xf32>
    %29 = arith.addf %27, %28 : vector<8x128xf32>
    %30 = vector.broadcast %3 : vector<1x128xf32> to vector<8x128xf32>
    %31 = arith.addf %29, %30 : vector<8x128xf32>
    %32 = arith.negf %26 : vector<8x128xf32>
    %33 = math.exp %32 : vector<8x128xf32>
    %cst_16 = arith.constant 1.000000e+00 : f32
    %34 = vector.broadcast %cst_16 : f32 to vector<8x128xf32>
    %35 = arith.addf %34, %33 : vector<8x128xf32>
    %36 = arith.divf %34, %35 : vector<8x128xf32>
    %37 = math.tanh %26 : vector<8x128xf32>
    %38 = vector.extract_strided_slice %36 {offsets = [0, 0], sizes = [8, 32], strides = [1, 1]} : vector<8x128xf32> to vector<8x32xf32>
    %39 = vector.extract_strided_slice %36 {offsets = [0, 32], sizes = [8, 32], strides = [1, 1]} : vector<8x128xf32> to vector<8x32xf32>
    %40 = vector.extract_strided_slice %37 {offsets = [0, 64], sizes = [8, 32], strides = [1, 1]} : vector<8x128xf32> to vector<8x32xf32>
    %41 = vector.extract_strided_slice %36 {offsets = [0, 96], sizes = [8, 32], strides = [1, 1]} : vector<8x128xf32> to vector<8x32xf32>
    %42 = arith.mulf %39, %19 : vector<8x32xf32>
    %43 = arith.mulf %38, %40 : vector<8x32xf32>
    %44 = arith.addf %42, %43 : vector<8x32xf32>
    %45 = math.tanh %44 : vector<8x32xf32>
    %46 = arith.mulf %41, %45 : vector<8x32xf32>
    %47 = arith.negf %31 : vector<8x128xf32>
    %48 = math.exp %47 : vector<8x128xf32>
    %cst_17 = arith.constant 1.000000e+00 : f32
    %49 = vector.broadcast %cst_17 : f32 to vector<8x128xf32>
    %50 = arith.addf %49, %48 : vector<8x128xf32>
    %51 = arith.divf %49, %50 : vector<8x128xf32>
    %52 = math.tanh %31 : vector<8x128xf32>
    %53 = vector.extract_strided_slice %51 {offsets = [0, 0], sizes = [8, 32], strides = [1, 1]} : vector<8x128xf32> to vector<8x32xf32>
    %54 = vector.extract_strided_slice %51 {offsets = [0, 32], sizes = [8, 32], strides = [1, 1]} : vector<8x128xf32> to vector<8x32xf32>
    %55 = vector.extract_strided_slice %52 {offsets = [0, 64], sizes = [8, 32], strides = [1, 1]} : vector<8x128xf32> to vector<8x32xf32>
    %56 = vector.extract_strided_slice %51 {offsets = [0, 96], sizes = [8, 32], strides = [1, 1]} : vector<8x128xf32> to vector<8x32xf32>
    %57 = arith.mulf %54, %4 : vector<8x32xf32>
    %58 = arith.mulf %53, %55 : vector<8x32xf32>
    %59 = arith.addf %57, %58 : vector<8x32xf32>
    %60 = math.tanh %59 : vector<8x32xf32>
    %61 = arith.mulf %56, %60 : vector<8x32xf32>
    %c2_i32 = arith.constant 2 : i32
    %62 = arith.index_cast %c2_i32 : i32 to index
    %c0_18 = arith.constant 0 : index
    %c0_19 = arith.constant 0 : index
    %63 = vector.load %arg1[%62, %c0_18, %c0_19] : memref<8x8x128xf32, #tpu.memory_space<vmem>>, vector<1x8x128xf32>
    %64 = vector.shape_cast %63 : vector<1x8x128xf32> to vector<8x128xf32>
    %cst_20 = arith.constant dense<0.000000e+00> : vector<8x128xf32>
    %65 = tpu.matmul %46, %0, %cst_20 {dimension_numbers = #tpu.dot_dimension_numbers<[1], [0], [0], [1], [0, 0, 1, 1], [], []>} : vector<8x32xf32>, vector<32x128xf32>, vector<8x128xf32> -> vector<8x128xf32>
    %66 = arith.addf %64, %65 : vector<8x128xf32>
    %cst_21 = arith.constant dense<0.000000e+00> : vector<8x128xf32>
    %67 = tpu.matmul %46, %1, %cst_21 {dimension_numbers = #tpu.dot_dimension_numbers<[1], [0], [0], [1], [0, 0, 1, 1], [], []>} : vector<8x32xf32>, vector<32x128xf32>, vector<8x128xf32> -> vector<8x128xf32>
    %cst_22 = arith.constant dense<0.000000e+00> : vector<8x128xf32>
    %68 = tpu.matmul %61, %2, %cst_22 {dimension_numbers = #tpu.dot_dimension_numbers<[1], [0], [0], [1], [0, 0, 1, 1], [], []>} : vector<8x32xf32>, vector<32x128xf32>, vector<8x128xf32> -> vector<8x128xf32>
    %69 = arith.addf %67, %68 : vector<8x128xf32>
    %70 = vector.broadcast %3 : vector<1x128xf32> to vector<8x128xf32>
    %71 = arith.addf %69, %70 : vector<8x128xf32>
    %72 = arith.negf %66 : vector<8x128xf32>
    %73 = math.exp %72 : vector<8x128xf32>
    %cst_23 = arith.constant 1.000000e+00 : f32
    %74 = vector.broadcast %cst_23 : f32 to vector<8x128xf32>
    %75 = arith.addf %74, %73 : vector<8x128xf32>
    %76 = arith.divf %74, %75 : vector<8x128xf32>
    %77 = math.tanh %66 : vector<8x128xf32>
    %78 = vector.extract_strided_slice %76 {offsets = [0, 0], sizes = [8, 32], strides = [1, 1]} : vector<8x128xf32> to vector<8x32xf32>
    %79 = vector.extract_strided_slice %76 {offsets = [0, 32], sizes = [8, 32], strides = [1, 1]} : vector<8x128xf32> to vector<8x32xf32>
    %80 = vector.extract_strided_slice %77 {offsets = [0, 64], sizes = [8, 32], strides = [1, 1]} : vector<8x128xf32> to vector<8x32xf32>
    %81 = vector.extract_strided_slice %76 {offsets = [0, 96], sizes = [8, 32], strides = [1, 1]} : vector<8x128xf32> to vector<8x32xf32>
    %82 = arith.mulf %79, %44 : vector<8x32xf32>
    %83 = arith.mulf %78, %80 : vector<8x32xf32>
    %84 = arith.addf %82, %83 : vector<8x32xf32>
    %85 = math.tanh %84 : vector<8x32xf32>
    %86 = arith.mulf %81, %85 : vector<8x32xf32>
    %87 = arith.negf %71 : vector<8x128xf32>
    %88 = math.exp %87 : vector<8x128xf32>
    %cst_24 = arith.constant 1.000000e+00 : f32
    %89 = vector.broadcast %cst_24 : f32 to vector<8x128xf32>
    %90 = arith.addf %89, %88 : vector<8x128xf32>
    %91 = arith.divf %89, %90 : vector<8x128xf32>
    %92 = math.tanh %71 : vector<8x128xf32>
    %93 = vector.extract_strided_slice %91 {offsets = [0, 0], sizes = [8, 32], strides = [1, 1]} : vector<8x128xf32> to vector<8x32xf32>
    %94 = vector.extract_strided_slice %91 {offsets = [0, 32], sizes = [8, 32], strides = [1, 1]} : vector<8x128xf32> to vector<8x32xf32>
    %95 = vector.extract_strided_slice %92 {offsets = [0, 64], sizes = [8, 32], strides = [1, 1]} : vector<8x128xf32> to vector<8x32xf32>
    %96 = vector.extract_strided_slice %91 {offsets = [0, 96], sizes = [8, 32], strides = [1, 1]} : vector<8x128xf32> to vector<8x32xf32>
    %97 = arith.mulf %94, %59 : vector<8x32xf32>
    %98 = arith.mulf %93, %95 : vector<8x32xf32>
    %99 = arith.addf %97, %98 : vector<8x32xf32>
    %100 = math.tanh %99 : vector<8x32xf32>
    %101 = arith.mulf %96, %100 : vector<8x32xf32>
    %c3_i32 = arith.constant 3 : i32
    %102 = arith.index_cast %c3_i32 : i32 to index
    %c0_25 = arith.constant 0 : index
    %c0_26 = arith.constant 0 : index
    %103 = vector.load %arg1[%102, %c0_25, %c0_26] : memref<8x8x128xf32, #tpu.memory_space<vmem>>, vector<1x8x128xf32>
    %104 = vector.shape_cast %103 : vector<1x8x128xf32> to vector<8x128xf32>
    %cst_27 = arith.constant dense<0.000000e+00> : vector<8x128xf32>
    %105 = tpu.matmul %86, %0, %cst_27 {dimension_numbers = #tpu.dot_dimension_numbers<[1], [0], [0], [1], [0, 0, 1, 1], [], []>} : vector<8x32xf32>, vector<32x128xf32>, vector<8x128xf32> -> vector<8x128xf32>
    %106 = arith.addf %104, %105 : vector<8x128xf32>
    %cst_28 = arith.constant dense<0.000000e+00> : vector<8x128xf32>
    %107 = tpu.matmul %86, %1, %cst_28 {dimension_numbers = #tpu.dot_dimension_numbers<[1], [0], [0], [1], [0, 0, 1, 1], [], []>} : vector<8x32xf32>, vector<32x128xf32>, vector<8x128xf32> -> vector<8x128xf32>
    %cst_29 = arith.constant dense<0.000000e+00> : vector<8x128xf32>
    %108 = tpu.matmul %101, %2, %cst_29 {dimension_numbers = #tpu.dot_dimension_numbers<[1], [0], [0], [1], [0, 0, 1, 1], [], []>} : vector<8x32xf32>, vector<32x128xf32>, vector<8x128xf32> -> vector<8x128xf32>
    %109 = arith.addf %107, %108 : vector<8x128xf32>
    %110 = vector.broadcast %3 : vector<1x128xf32> to vector<8x128xf32>
    %111 = arith.addf %109, %110 : vector<8x128xf32>
    %112 = arith.negf %106 : vector<8x128xf32>
    %113 = math.exp %112 : vector<8x128xf32>
    %cst_30 = arith.constant 1.000000e+00 : f32
    %114 = vector.broadcast %cst_30 : f32 to vector<8x128xf32>
    %115 = arith.addf %114, %113 : vector<8x128xf32>
    %116 = arith.divf %114, %115 : vector<8x128xf32>
    %117 = math.tanh %106 : vector<8x128xf32>
    %118 = vector.extract_strided_slice %116 {offsets = [0, 0], sizes = [8, 32], strides = [1, 1]} : vector<8x128xf32> to vector<8x32xf32>
    %119 = vector.extract_strided_slice %116 {offsets = [0, 32], sizes = [8, 32], strides = [1, 1]} : vector<8x128xf32> to vector<8x32xf32>
    %120 = vector.extract_strided_slice %117 {offsets = [0, 64], sizes = [8, 32], strides = [1, 1]} : vector<8x128xf32> to vector<8x32xf32>
    %121 = vector.extract_strided_slice %116 {offsets = [0, 96], sizes = [8, 32], strides = [1, 1]} : vector<8x128xf32> to vector<8x32xf32>
    %122 = arith.mulf %119, %84 : vector<8x32xf32>
    %123 = arith.mulf %118, %120 : vector<8x32xf32>
    %124 = arith.addf %122, %123 : vector<8x32xf32>
    %125 = math.tanh %124 : vector<8x32xf32>
    %126 = arith.mulf %121, %125 : vector<8x32xf32>
    %127 = arith.negf %111 : vector<8x128xf32>
    %128 = math.exp %127 : vector<8x128xf32>
    %cst_31 = arith.constant 1.000000e+00 : f32
    %129 = vector.broadcast %cst_31 : f32 to vector<8x128xf32>
    %130 = arith.addf %129, %128 : vector<8x128xf32>
    %131 = arith.divf %129, %130 : vector<8x128xf32>
    %132 = math.tanh %111 : vector<8x128xf32>
    %133 = vector.extract_strided_slice %131 {offsets = [0, 0], sizes = [8, 32], strides = [1, 1]} : vector<8x128xf32> to vector<8x32xf32>
    %134 = vector.extract_strided_slice %131 {offsets = [0, 32], sizes = [8, 32], strides = [1, 1]} : vector<8x128xf32> to vector<8x32xf32>
    %135 = vector.extract_strided_slice %132 {offsets = [0, 64], sizes = [8, 32], strides = [1, 1]} : vector<8x128xf32> to vector<8x32xf32>
    %136 = vector.extract_strided_slice %131 {offsets = [0, 96], sizes = [8, 32], strides = [1, 1]} : vector<8x128xf32> to vector<8x32xf32>
    %137 = arith.mulf %134, %99 : vector<8x32xf32>
    %138 = arith.mulf %133, %135 : vector<8x32xf32>
    %139 = arith.addf %137, %138 : vector<8x32xf32>
    %140 = math.tanh %139 : vector<8x32xf32>
    %141 = arith.mulf %136, %140 : vector<8x32xf32>
    %c4_i32 = arith.constant 4 : i32
    %142 = arith.index_cast %c4_i32 : i32 to index
    %c0_32 = arith.constant 0 : index
    %c0_33 = arith.constant 0 : index
    %143 = vector.load %arg1[%142, %c0_32, %c0_33] : memref<8x8x128xf32, #tpu.memory_space<vmem>>, vector<1x8x128xf32>
    %144 = vector.shape_cast %143 : vector<1x8x128xf32> to vector<8x128xf32>
    %cst_34 = arith.constant dense<0.000000e+00> : vector<8x128xf32>
    %145 = tpu.matmul %126, %0, %cst_34 {dimension_numbers = #tpu.dot_dimension_numbers<[1], [0], [0], [1], [0, 0, 1, 1], [], []>} : vector<8x32xf32>, vector<32x128xf32>, vector<8x128xf32> -> vector<8x128xf32>
    %146 = arith.addf %144, %145 : vector<8x128xf32>
    %cst_35 = arith.constant dense<0.000000e+00> : vector<8x128xf32>
    %147 = tpu.matmul %126, %1, %cst_35 {dimension_numbers = #tpu.dot_dimension_numbers<[1], [0], [0], [1], [0, 0, 1, 1], [], []>} : vector<8x32xf32>, vector<32x128xf32>, vector<8x128xf32> -> vector<8x128xf32>
    %cst_36 = arith.constant dense<0.000000e+00> : vector<8x128xf32>
    %148 = tpu.matmul %141, %2, %cst_36 {dimension_numbers = #tpu.dot_dimension_numbers<[1], [0], [0], [1], [0, 0, 1, 1], [], []>} : vector<8x32xf32>, vector<32x128xf32>, vector<8x128xf32> -> vector<8x128xf32>
    %149 = arith.addf %147, %148 : vector<8x128xf32>
    %150 = vector.broadcast %3 : vector<1x128xf32> to vector<8x128xf32>
    %151 = arith.addf %149, %150 : vector<8x128xf32>
    %152 = arith.negf %146 : vector<8x128xf32>
    %153 = math.exp %152 : vector<8x128xf32>
    %cst_37 = arith.constant 1.000000e+00 : f32
    %154 = vector.broadcast %cst_37 : f32 to vector<8x128xf32>
    %155 = arith.addf %154, %153 : vector<8x128xf32>
    %156 = arith.divf %154, %155 : vector<8x128xf32>
    %157 = math.tanh %146 : vector<8x128xf32>
    %158 = vector.extract_strided_slice %156 {offsets = [0, 0], sizes = [8, 32], strides = [1, 1]} : vector<8x128xf32> to vector<8x32xf32>
    %159 = vector.extract_strided_slice %156 {offsets = [0, 32], sizes = [8, 32], strides = [1, 1]} : vector<8x128xf32> to vector<8x32xf32>
    %160 = vector.extract_strided_slice %157 {offsets = [0, 64], sizes = [8, 32], strides = [1, 1]} : vector<8x128xf32> to vector<8x32xf32>
    %161 = vector.extract_strided_slice %156 {offsets = [0, 96], sizes = [8, 32], strides = [1, 1]} : vector<8x128xf32> to vector<8x32xf32>
    %162 = arith.mulf %159, %124 : vector<8x32xf32>
    %163 = arith.mulf %158, %160 : vector<8x32xf32>
    %164 = arith.addf %162, %163 : vector<8x32xf32>
    %165 = math.tanh %164 : vector<8x32xf32>
    %166 = arith.mulf %161, %165 : vector<8x32xf32>
    %167 = arith.negf %151 : vector<8x128xf32>
    %168 = math.exp %167 : vector<8x128xf32>
    %cst_38 = arith.constant 1.000000e+00 : f32
    %169 = vector.broadcast %cst_38 : f32 to vector<8x128xf32>
    %170 = arith.addf %169, %168 : vector<8x128xf32>
    %171 = arith.divf %169, %170 : vector<8x128xf32>
    %172 = math.tanh %151 : vector<8x128xf32>
    %173 = vector.extract_strided_slice %171 {offsets = [0, 0], sizes = [8, 32], strides = [1, 1]} : vector<8x128xf32> to vector<8x32xf32>
    %174 = vector.extract_strided_slice %171 {offsets = [0, 32], sizes = [8, 32], strides = [1, 1]} : vector<8x128xf32> to vector<8x32xf32>
    %175 = vector.extract_strided_slice %172 {offsets = [0, 64], sizes = [8, 32], strides = [1, 1]} : vector<8x128xf32> to vector<8x32xf32>
    %176 = vector.extract_strided_slice %171 {offsets = [0, 96], sizes = [8, 32], strides = [1, 1]} : vector<8x128xf32> to vector<8x32xf32>
    %177 = arith.mulf %174, %139 : vector<8x32xf32>
    %178 = arith.mulf %173, %175 : vector<8x32xf32>
    %179 = arith.addf %177, %178 : vector<8x32xf32>
    %180 = math.tanh %179 : vector<8x32xf32>
    %181 = arith.mulf %176, %180 : vector<8x32xf32>
    %c5_i32 = arith.constant 5 : i32
    %182 = arith.index_cast %c5_i32 : i32 to index
    %c0_39 = arith.constant 0 : index
    %c0_40 = arith.constant 0 : index
    %183 = vector.load %arg1[%182, %c0_39, %c0_40] : memref<8x8x128xf32, #tpu.memory_space<vmem>>, vector<1x8x128xf32>
    %184 = vector.shape_cast %183 : vector<1x8x128xf32> to vector<8x128xf32>
    %cst_41 = arith.constant dense<0.000000e+00> : vector<8x128xf32>
    %185 = tpu.matmul %166, %0, %cst_41 {dimension_numbers = #tpu.dot_dimension_numbers<[1], [0], [0], [1], [0, 0, 1, 1], [], []>} : vector<8x32xf32>, vector<32x128xf32>, vector<8x128xf32> -> vector<8x128xf32>
    %186 = arith.addf %184, %185 : vector<8x128xf32>
    %cst_42 = arith.constant dense<0.000000e+00> : vector<8x128xf32>
    %187 = tpu.matmul %166, %1, %cst_42 {dimension_numbers = #tpu.dot_dimension_numbers<[1], [0], [0], [1], [0, 0, 1, 1], [], []>} : vector<8x32xf32>, vector<32x128xf32>, vector<8x128xf32> -> vector<8x128xf32>
    %cst_43 = arith.constant dense<0.000000e+00> : vector<8x128xf32>
    %188 = tpu.matmul %181, %2, %cst_43 {dimension_numbers = #tpu.dot_dimension_numbers<[1], [0], [0], [1], [0, 0, 1, 1], [], []>} : vector<8x32xf32>, vector<32x128xf32>, vector<8x128xf32> -> vector<8x128xf32>
    %189 = arith.addf %187, %188 : vector<8x128xf32>
    %190 = vector.broadcast %3 : vector<1x128xf32> to vector<8x128xf32>
    %191 = arith.addf %189, %190 : vector<8x128xf32>
    %192 = arith.negf %186 : vector<8x128xf32>
    %193 = math.exp %192 : vector<8x128xf32>
    %cst_44 = arith.constant 1.000000e+00 : f32
    %194 = vector.broadcast %cst_44 : f32 to vector<8x128xf32>
    %195 = arith.addf %194, %193 : vector<8x128xf32>
    %196 = arith.divf %194, %195 : vector<8x128xf32>
    %197 = math.tanh %186 : vector<8x128xf32>
    %198 = vector.extract_strided_slice %196 {offsets = [0, 0], sizes = [8, 32], strides = [1, 1]} : vector<8x128xf32> to vector<8x32xf32>
    %199 = vector.extract_strided_slice %196 {offsets = [0, 32], sizes = [8, 32], strides = [1, 1]} : vector<8x128xf32> to vector<8x32xf32>
    %200 = vector.extract_strided_slice %197 {offsets = [0, 64], sizes = [8, 32], strides = [1, 1]} : vector<8x128xf32> to vector<8x32xf32>
    %201 = vector.extract_strided_slice %196 {offsets = [0, 96], sizes = [8, 32], strides = [1, 1]} : vector<8x128xf32> to vector<8x32xf32>
    %202 = arith.mulf %199, %164 : vector<8x32xf32>
    %203 = arith.mulf %198, %200 : vector<8x32xf32>
    %204 = arith.addf %202, %203 : vector<8x32xf32>
    %205 = math.tanh %204 : vector<8x32xf32>
    %206 = arith.mulf %201, %205 : vector<8x32xf32>
    %207 = arith.negf %191 : vector<8x128xf32>
    %208 = math.exp %207 : vector<8x128xf32>
    %cst_45 = arith.constant 1.000000e+00 : f32
    %209 = vector.broadcast %cst_45 : f32 to vector<8x128xf32>
    %210 = arith.addf %209, %208 : vector<8x128xf32>
    %211 = arith.divf %209, %210 : vector<8x128xf32>
    %212 = math.tanh %191 : vector<8x128xf32>
    %213 = vector.extract_strided_slice %211 {offsets = [0, 0], sizes = [8, 32], strides = [1, 1]} : vector<8x128xf32> to vector<8x32xf32>
    %214 = vector.extract_strided_slice %211 {offsets = [0, 32], sizes = [8, 32], strides = [1, 1]} : vector<8x128xf32> to vector<8x32xf32>
    %215 = vector.extract_strided_slice %212 {offsets = [0, 64], sizes = [8, 32], strides = [1, 1]} : vector<8x128xf32> to vector<8x32xf32>
    %216 = vector.extract_strided_slice %211 {offsets = [0, 96], sizes = [8, 32], strides = [1, 1]} : vector<8x128xf32> to vector<8x32xf32>
    %217 = arith.mulf %214, %179 : vector<8x32xf32>
    %218 = arith.mulf %213, %215 : vector<8x32xf32>
    %219 = arith.addf %217, %218 : vector<8x32xf32>
    %220 = math.tanh %219 : vector<8x32xf32>
    %221 = arith.mulf %216, %220 : vector<8x32xf32>
    %c6_i32 = arith.constant 6 : i32
    %222 = arith.index_cast %c6_i32 : i32 to index
    %c0_46 = arith.constant 0 : index
    %c0_47 = arith.constant 0 : index
    %223 = vector.load %arg1[%222, %c0_46, %c0_47] : memref<8x8x128xf32, #tpu.memory_space<vmem>>, vector<1x8x128xf32>
    %224 = vector.shape_cast %223 : vector<1x8x128xf32> to vector<8x128xf32>
    %cst_48 = arith.constant dense<0.000000e+00> : vector<8x128xf32>
    %225 = tpu.matmul %206, %0, %cst_48 {dimension_numbers = #tpu.dot_dimension_numbers<[1], [0], [0], [1], [0, 0, 1, 1], [], []>} : vector<8x32xf32>, vector<32x128xf32>, vector<8x128xf32> -> vector<8x128xf32>
    %226 = arith.addf %224, %225 : vector<8x128xf32>
    %cst_49 = arith.constant dense<0.000000e+00> : vector<8x128xf32>
    %227 = tpu.matmul %206, %1, %cst_49 {dimension_numbers = #tpu.dot_dimension_numbers<[1], [0], [0], [1], [0, 0, 1, 1], [], []>} : vector<8x32xf32>, vector<32x128xf32>, vector<8x128xf32> -> vector<8x128xf32>
    %cst_50 = arith.constant dense<0.000000e+00> : vector<8x128xf32>
    %228 = tpu.matmul %221, %2, %cst_50 {dimension_numbers = #tpu.dot_dimension_numbers<[1], [0], [0], [1], [0, 0, 1, 1], [], []>} : vector<8x32xf32>, vector<32x128xf32>, vector<8x128xf32> -> vector<8x128xf32>
    %229 = arith.addf %227, %228 : vector<8x128xf32>
    %230 = vector.broadcast %3 : vector<1x128xf32> to vector<8x128xf32>
    %231 = arith.addf %229, %230 : vector<8x128xf32>
    %232 = arith.negf %226 : vector<8x128xf32>
    %233 = math.exp %232 : vector<8x128xf32>
    %cst_51 = arith.constant 1.000000e+00 : f32
    %234 = vector.broadcast %cst_51 : f32 to vector<8x128xf32>
    %235 = arith.addf %234, %233 : vector<8x128xf32>
    %236 = arith.divf %234, %235 : vector<8x128xf32>
    %237 = math.tanh %226 : vector<8x128xf32>
    %238 = vector.extract_strided_slice %236 {offsets = [0, 0], sizes = [8, 32], strides = [1, 1]} : vector<8x128xf32> to vector<8x32xf32>
    %239 = vector.extract_strided_slice %236 {offsets = [0, 32], sizes = [8, 32], strides = [1, 1]} : vector<8x128xf32> to vector<8x32xf32>
    %240 = vector.extract_strided_slice %237 {offsets = [0, 64], sizes = [8, 32], strides = [1, 1]} : vector<8x128xf32> to vector<8x32xf32>
    %241 = vector.extract_strided_slice %236 {offsets = [0, 96], sizes = [8, 32], strides = [1, 1]} : vector<8x128xf32> to vector<8x32xf32>
    %242 = arith.mulf %239, %204 : vector<8x32xf32>
    %243 = arith.mulf %238, %240 : vector<8x32xf32>
    %244 = arith.addf %242, %243 : vector<8x32xf32>
    %245 = math.tanh %244 : vector<8x32xf32>
    %246 = arith.mulf %241, %245 : vector<8x32xf32>
    %247 = arith.negf %231 : vector<8x128xf32>
    %248 = math.exp %247 : vector<8x128xf32>
    %cst_52 = arith.constant 1.000000e+00 : f32
    %249 = vector.broadcast %cst_52 : f32 to vector<8x128xf32>
    %250 = arith.addf %249, %248 : vector<8x128xf32>
    %251 = arith.divf %249, %250 : vector<8x128xf32>
    %252 = math.tanh %231 : vector<8x128xf32>
    %253 = vector.extract_strided_slice %251 {offsets = [0, 0], sizes = [8, 32], strides = [1, 1]} : vector<8x128xf32> to vector<8x32xf32>
    %254 = vector.extract_strided_slice %251 {offsets = [0, 32], sizes = [8, 32], strides = [1, 1]} : vector<8x128xf32> to vector<8x32xf32>
    %255 = vector.extract_strided_slice %252 {offsets = [0, 64], sizes = [8, 32], strides = [1, 1]} : vector<8x128xf32> to vector<8x32xf32>
    %256 = vector.extract_strided_slice %251 {offsets = [0, 96], sizes = [8, 32], strides = [1, 1]} : vector<8x128xf32> to vector<8x32xf32>
    %257 = arith.mulf %254, %219 : vector<8x32xf32>
    %258 = arith.mulf %253, %255 : vector<8x32xf32>
    %259 = arith.addf %257, %258 : vector<8x32xf32>
    %260 = math.tanh %259 : vector<8x32xf32>
    %261 = arith.mulf %256, %260 : vector<8x32xf32>
    %c7_i32 = arith.constant 7 : i32
    %262 = arith.index_cast %c7_i32 : i32 to index
    %c0_53 = arith.constant 0 : index
    %c0_54 = arith.constant 0 : index
    %263 = vector.load %arg1[%262, %c0_53, %c0_54] : memref<8x8x128xf32, #tpu.memory_space<vmem>>, vector<1x8x128xf32>
    %264 = vector.shape_cast %263 : vector<1x8x128xf32> to vector<8x128xf32>
    %cst_55 = arith.constant dense<0.000000e+00> : vector<8x128xf32>
    %265 = tpu.matmul %246, %0, %cst_55 {dimension_numbers = #tpu.dot_dimension_numbers<[1], [0], [0], [1], [0, 0, 1, 1], [], []>} : vector<8x32xf32>, vector<32x128xf32>, vector<8x128xf32> -> vector<8x128xf32>
    %266 = arith.addf %264, %265 : vector<8x128xf32>
    %cst_56 = arith.constant dense<0.000000e+00> : vector<8x128xf32>
    %267 = tpu.matmul %246, %1, %cst_56 {dimension_numbers = #tpu.dot_dimension_numbers<[1], [0], [0], [1], [0, 0, 1, 1], [], []>} : vector<8x32xf32>, vector<32x128xf32>, vector<8x128xf32> -> vector<8x128xf32>
    %cst_57 = arith.constant dense<0.000000e+00> : vector<8x128xf32>
    %268 = tpu.matmul %261, %2, %cst_57 {dimension_numbers = #tpu.dot_dimension_numbers<[1], [0], [0], [1], [0, 0, 1, 1], [], []>} : vector<8x32xf32>, vector<32x128xf32>, vector<8x128xf32> -> vector<8x128xf32>
    %269 = arith.addf %267, %268 : vector<8x128xf32>
    %270 = vector.broadcast %3 : vector<1x128xf32> to vector<8x128xf32>
    %271 = arith.addf %269, %270 : vector<8x128xf32>
    %272 = arith.negf %266 : vector<8x128xf32>
    %273 = math.exp %272 : vector<8x128xf32>
    %cst_58 = arith.constant 1.000000e+00 : f32
    %274 = vector.broadcast %cst_58 : f32 to vector<8x128xf32>
    %275 = arith.addf %274, %273 : vector<8x128xf32>
    %276 = arith.divf %274, %275 : vector<8x128xf32>
    %277 = math.tanh %266 : vector<8x128xf32>
    %278 = vector.extract_strided_slice %276 {offsets = [0, 0], sizes = [8, 32], strides = [1, 1]} : vector<8x128xf32> to vector<8x32xf32>
    %279 = vector.extract_strided_slice %276 {offsets = [0, 32], sizes = [8, 32], strides = [1, 1]} : vector<8x128xf32> to vector<8x32xf32>
    %280 = vector.extract_strided_slice %277 {offsets = [0, 64], sizes = [8, 32], strides = [1, 1]} : vector<8x128xf32> to vector<8x32xf32>
    %281 = vector.extract_strided_slice %276 {offsets = [0, 96], sizes = [8, 32], strides = [1, 1]} : vector<8x128xf32> to vector<8x32xf32>
    %282 = arith.mulf %279, %244 : vector<8x32xf32>
    %283 = arith.mulf %278, %280 : vector<8x32xf32>
    %284 = arith.addf %282, %283 : vector<8x32xf32>
    %285 = math.tanh %284 : vector<8x32xf32>
    %286 = arith.mulf %281, %285 : vector<8x32xf32>
    %287 = arith.negf %271 : vector<8x128xf32>
    %288 = math.exp %287 : vector<8x128xf32>
    %cst_59 = arith.constant 1.000000e+00 : f32
    %289 = vector.broadcast %cst_59 : f32 to vector<8x128xf32>
    %290 = arith.addf %289, %288 : vector<8x128xf32>
    %291 = arith.divf %289, %290 : vector<8x128xf32>
    %292 = math.tanh %271 : vector<8x128xf32>
    %293 = vector.extract_strided_slice %291 {offsets = [0, 0], sizes = [8, 32], strides = [1, 1]} : vector<8x128xf32> to vector<8x32xf32>
    %294 = vector.extract_strided_slice %291 {offsets = [0, 32], sizes = [8, 32], strides = [1, 1]} : vector<8x128xf32> to vector<8x32xf32>
    %295 = vector.extract_strided_slice %292 {offsets = [0, 64], sizes = [8, 32], strides = [1, 1]} : vector<8x128xf32> to vector<8x32xf32>
    %296 = vector.extract_strided_slice %291 {offsets = [0, 96], sizes = [8, 32], strides = [1, 1]} : vector<8x128xf32> to vector<8x32xf32>
    %297 = arith.mulf %294, %259 : vector<8x32xf32>
    %298 = arith.mulf %293, %295 : vector<8x32xf32>
    %299 = arith.addf %297, %298 : vector<8x32xf32>
    %300 = math.tanh %299 : vector<8x32xf32>
    %301 = arith.mulf %296, %300 : vector<8x32xf32>
    %c7_i32_60 = arith.constant 7 : i32
    %cst_61 = arith.constant dense<0.000000e+00> : vector<8x128xf32>
    %302 = tpu.matmul %286, %1, %cst_61 {dimension_numbers = #tpu.dot_dimension_numbers<[1], [0], [0], [1], [0, 0, 1, 1], [], []>} : vector<8x32xf32>, vector<32x128xf32>, vector<8x128xf32> -> vector<8x128xf32>
    %cst_62 = arith.constant dense<0.000000e+00> : vector<8x128xf32>
    %303 = tpu.matmul %301, %2, %cst_62 {dimension_numbers = #tpu.dot_dimension_numbers<[1], [0], [0], [1], [0, 0, 1, 1], [], []>} : vector<8x32xf32>, vector<32x128xf32>, vector<8x128xf32> -> vector<8x128xf32>
    %304 = arith.addf %302, %303 : vector<8x128xf32>
    %305 = vector.broadcast %3 : vector<1x128xf32> to vector<8x128xf32>
    %306 = arith.addf %304, %305 : vector<8x128xf32>
    %307 = arith.negf %306 : vector<8x128xf32>
    %308 = math.exp %307 : vector<8x128xf32>
    %cst_63 = arith.constant 1.000000e+00 : f32
    %309 = vector.broadcast %cst_63 : f32 to vector<8x128xf32>
    %310 = arith.addf %309, %308 : vector<8x128xf32>
    %311 = arith.divf %309, %310 : vector<8x128xf32>
    %312 = math.tanh %306 : vector<8x128xf32>
    %313 = vector.extract_strided_slice %311 {offsets = [0, 0], sizes = [8, 32], strides = [1, 1]} : vector<8x128xf32> to vector<8x32xf32>
    %314 = vector.extract_strided_slice %311 {offsets = [0, 32], sizes = [8, 32], strides = [1, 1]} : vector<8x128xf32> to vector<8x32xf32>
    %315 = vector.extract_strided_slice %312 {offsets = [0, 64], sizes = [8, 32], strides = [1, 1]} : vector<8x128xf32> to vector<8x32xf32>
    %316 = vector.extract_strided_slice %311 {offsets = [0, 96], sizes = [8, 32], strides = [1, 1]} : vector<8x128xf32> to vector<8x32xf32>
    %317 = arith.mulf %314, %299 : vector<8x32xf32>
    %318 = arith.mulf %313, %315 : vector<8x32xf32>
    %319 = arith.addf %317, %318 : vector<8x32xf32>
    %320 = math.tanh %319 : vector<8x32xf32>
    %321 = arith.mulf %316, %320 : vector<8x32xf32>
    %c0_64 = arith.constant 0 : index
    %c0_65 = arith.constant 0 : index
    %322 = vector.load %arg6[%c0_64, %c0_65] : memref<32x128xf32, #tpu.memory_space<vmem>>, vector<32x128xf32>
    %cst_66 = arith.constant dense<0.000000e+00> : vector<8x128xf32>
    %323 = tpu.matmul %321, %322, %cst_66 {dimension_numbers = #tpu.dot_dimension_numbers<[1], [0], [0], [1], [0, 0, 1, 1], [], []>} : vector<8x32xf32>, vector<32x128xf32>, vector<8x128xf32> -> vector<8x128xf32>
    %c0_67 = arith.constant 0 : index
    %c0_68 = arith.constant 0 : index
    %324 = vector.load %arg7[%c0_67, %c0_68] : memref<1x128xf32, #tpu.memory_space<vmem>>, vector<1x128xf32>
    %325 = vector.broadcast %324 : vector<1x128xf32> to vector<8x128xf32>
    %326 = arith.addf %323, %325 : vector<8x128xf32>
    %c0_69 = arith.constant 0 : index
    %c0_70 = arith.constant 0 : index
    %327 = vector.load %arg8[%c0_69, %c0_70] : memref<8x128xf32, #tpu.memory_space<vmem>>, vector<8x128xf32>
    tpu.vector_store %arg8[%c0_69, %c0_70], %326 {strides = array<i32>} : memref<8x128xf32, #tpu.memory_space<vmem>>, vector<8x128xf32>,
    return
  }
  func.func @transform_0(%arg0: i32) -> (i32, i32, i32) {
    %c0_i32 = arith.constant 0 : i32
    %c0_i32_0 = arith.constant 0 : i32
    %c0_i32_1 = arith.constant 0 : i32
    return %c0_i32, %arg0, %c0_i32_0 : i32, i32, i32
  }
  func.func @transform_1(%arg0: i32) -> (i32, i32) {
    %c0_i32 = arith.constant 0 : i32
    %c0_i32_0 = arith.constant 0 : i32
    %c0_i32_1 = arith.constant 0 : i32
    return %c0_i32, %c0_i32_0 : i32, i32
  }
  func.func @transform_2(%arg0: i32) -> (i32, i32) {
    %c0_i32 = arith.constant 0 : i32
    %c0_i32_0 = arith.constant 0 : i32
    %c0_i32_1 = arith.constant 0 : i32
    return %c0_i32, %c0_i32_0 : i32, i32
  }
  func.func @transform_3(%arg0: i32) -> (i32, i32) {
    %c0_i32 = arith.constant 0 : i32
    %c0_i32_0 = arith.constant 0 : i32
    %c0_i32_1 = arith.constant 0 : i32
    return %c0_i32, %c0_i32_0 : i32, i32
  }
  func.func @transform_4(%arg0: i32) -> (i32, i32) {
    %c0_i32 = arith.constant 0 : i32
    %c0_i32_0 = arith.constant 0 : i32
    %c0_i32_1 = arith.constant 0 : i32
    return %c0_i32, %c0_i32_0 : i32, i32
  }
  func.func @transform_5(%arg0: i32) -> (i32, i32) {
    %c0_i32 = arith.constant 0 : i32
    %c0_i32_0 = arith.constant 0 : i32
    %c0_i32_1 = arith.constant 0 : i32
    return %c0_i32, %c0_i32_0 : i32, i32
  }
  func.func @transform_6(%arg0: i32) -> (i32, i32) {
    %c0_i32 = arith.constant 0 : i32
    %c0_i32_0 = arith.constant 0 : i32
    %c0_i32_1 = arith.constant 0 : i32
    return %c0_i32, %c0_i32_0 : i32, i32
  }
  func.func @transform_7(%arg0: i32) -> (i32, i32) {
    %c0_i32 = arith.constant 0 : i32
    %c0_i32_0 = arith.constant 0 : i32
    return %arg0, %c0_i32 : i32, i32
  }
}

</mosaic_0001>

<llo_original>
// kernel: tpu_custom_call.1
$region0: #{tpu_custom_call.1}
  #allocation0 [shape = 'u32[]', space=smem, size = 0x4, offset = 0x4, fixed_abs, tag = 'smem constant byte address 0x4 - core index']
  #allocation1 [shape = 'u32[72,128]{1,0:T(1,128)}', space=vmem, size = 0x9000, scoped, tag = 'internal scratch']
  %s0 = inlined_call_operand.hbm [shape: f32[8,8,128], index: 0, kind: input, shape index: {}]
  %s1 = inlined_call_operand.hbm [shape: f32[32,128], index: 1, kind: input, shape index: {}]
  %s2 = inlined_call_operand.hbm [shape: f32[32,128], index: 2, kind: input, shape index: {}]
  %s3 = inlined_call_operand.hbm [shape: f32[32,128], index: 3, kind: input, shape index: {}]
  %s4 = inlined_call_operand.vmem [shape: f32[1,128], index: 4, kind: input, shape index: {}]
  %s5 = inlined_call_operand.hbm [shape: f32[32,128], index: 5, kind: input, shape index: {}]
  %s6 = inlined_call_operand.vmem [shape: f32[1,128], index: 6, kind: input, shape index: {}]
  %s7 = inlined_call_operand.hbm [shape: f32[8,128], index: 7, kind: output, shape index: {}]
  %s8 = sld [smem:[#allocation0]]
  $region58: #{tpu_custom_call.1} parent=0
    _
  %s10 = ssub.s32 1, %s8
  %s11 = scalar_select 0, %s10, %s8
  $region1: #{tpu_custom_call.1} parent=0
    #allocation2 [shape = 'u8[32768]{0}', space=vmem, size = 0x8000, scoped, tag = 'input window, operand 0, single buffered']
    #allocation3 [shape = 's32[1]{0}', space=sflag, size = 0x4, scoped, tag = 'scoped memory for tpu_custom_call.1']
    #allocation4 [shape = 's32[1]{0}', space=sflag, size = 0x4, scoped, tag = 'scoped memory for tpu_custom_call.1']
    #allocation5 [shape = 'u8[16384]{0}', space=vmem, size = 0x4000, scoped, tag = 'input window, operand 1, single buffered']
    #allocation6 [shape = 's32[1]{0}', space=sflag, size = 0x4, scoped, tag = 'scoped memory for tpu_custom_call.1']
    #allocation7 [shape = 'u8[16384]{0}', space=vmem, size = 0x4000, scoped, tag = 'input window, operand 2, single buffered']
    #allocation8 [shape = 'u8[16384]{0}', space=vmem, size = 0x4000, scoped, tag = 'input window, operand 3, single buffered']
    #allocation9 [shape = 's32[1]{0}', space=sflag, size = 0x4, scoped, tag = 'scoped memory for tpu_custom_call.1']
    #allocation10 [shape = 'u8[16384]{0}', space=vmem, size = 0x4000, scoped, tag = 'input window, operand 5, single buffered']
    #allocation11 [shape = 'u8[4096]{0}', space=vmem, size = 0x1000, scoped, tag = 'output window, operand 0, single buffered']
    %12 = vsyncpa [#allocation3], 0
    %13 = vsyncpa [#allocation6], 0
    %14 = vsyncpa [#allocation9], 0
    %15 = vsyncpa [#allocation4], 0
    // Predicated region
    $region2: #{tpu_custom_call.1} parent=1 // pred_check
      _
    $region3: #{tpu_custom_call.1} parent=1 // pred_check_branch
      %17 = sbr.rel (0) target = $region5
    $region4: #{tpu_custom_call.1} parent=1 // pred_region
      %19 = vsyncadd [#allocation3], 0
      %s20 = sshll.u32 %s0, 4
      %s21 = int_to_ptr.hbm [resolvable:$true] %s20
      %s22 = sshll.u32 [#allocation2], 4
      %s23 = int_to_ptr.vmem [resolvable:$true] %s22
      %28 = dma.hbm_to_vmem [thread:$0]  %s21, 1024, %s23, [#allocation3], 128, 128, 8
    $region5: #{tpu_custom_call.1} parent=1 // pred_fallthru
      _
    // Predicated region
    $region6: #{tpu_custom_call.1} parent=1 // pred_check
      _
    $region7: #{tpu_custom_call.1} parent=1 // pred_check_branch
      %30 = sbr.rel (0) target = $region9
    $region8: #{tpu_custom_call.1} parent=1 // pred_region
      %32 = vsyncadd [#allocation6], 0
      %s33 = sshll.u32 %s1, 4
      %s34 = int_to_ptr.hbm [resolvable:$true] %s33
      %s35 = sshll.u32 [#allocation5], 4
      %s36 = int_to_ptr.vmem [resolvable:$true] %s35
      %41 = dma.hbm_to_vmem [thread:$0]  %s34, 512, %s36, [#allocation6], 128, 128, 8
    $region9: #{tpu_custom_call.1} parent=1 // pred_fallthru
      _
    // Predicated region
    $region10: #{tpu_custom_call.1} parent=1 // pred_check
      _
    $region11: #{tpu_custom_call.1} parent=1 // pred_check_branch
      %43 = sbr.rel (0) target = $region13
    $region12: #{tpu_custom_call.1} parent=1 // pred_region
      %45 = vsyncadd [#allocation6], 0
      %s46 = sshll.u32 %s2, 4
      %s47 = int_to_ptr.hbm [resolvable:$true] %s46
      %s48 = sshll.u32 [#allocation7], 4
      %s49 = int_to_ptr.vmem [resolvable:$true] %s48
      %54 = dma.hbm_to_vmem [thread:$0]  %s47, 512, %s49, [#allocation6], 128, 128, 8
    $region13: #{tpu_custom_call.1} parent=1 // pred_fallthru
      _
    // Predicated region
    $region14: #{tpu_custom_call.1} parent=1 // pred_check
      _
    $region15: #{tpu_custom_call.1} parent=1 // pred_check_branch
      %56 = sbr.rel (0) target = $region17
    $region16: #{tpu_custom_call.1} parent=1 // pred_region
      %58 = vsyncadd [#allocation9], 0
      %s59 = sshll.u32 %s3, 4
      %s60 = int_to_ptr.hbm [resolvable:$true] %s59
      %s61 = sshll.u32 [#allocation8], 4
      %s62 = int_to_ptr.vmem [resolvable:$true] %s61
      %67 = dma.hbm_to_vmem [thread:$0]  %s60, 512, %s62, [#allocation9], 128, 128, 8
    $region17: #{tpu_custom_call.1} parent=1 // pred_fallthru
      _
    // Predicated region
    $region18: #{tpu_custom_call.1} parent=1 // pred_check
      _
    $region19: #{tpu_custom_call.1} parent=1 // pred_check_branch
      %69 = sbr.rel (0) target = $region21
    $region20: #{tpu_custom_call.1} parent=1 // pred_region
      _
    $region21: #{tpu_custom_call.1} parent=1 // pred_fallthru
      _
    // Predicated region
    $region22: #{tpu_custom_call.1} parent=1 // pred_check
      _
    $region23: #{tpu_custom_call.1} parent=1 // pred_check_branch
      %71 = sbr.rel (0) target = $region25
    $region24: #{tpu_custom_call.1} parent=1 // pred_region
      %73 = vsyncadd [#allocation9], 0
      %s74 = sshll.u32 %s5, 4
      %s75 = int_to_ptr.hbm [resolvable:$true] %s74
      %s76 = sshll.u32 [#allocation10], 4
      %s77 = int_to_ptr.vmem [resolvable:$true] %s76
      %82 = dma.hbm_to_vmem [thread:$0]  %s75, 512, %s77, [#allocation9], 128, 128, 8
    $region25: #{tpu_custom_call.1} parent=1 // pred_fallthru
      _
    // Predicated region
    $region26: #{tpu_custom_call.1} parent=1 // pred_check
      _
    $region27: #{tpu_custom_call.1} parent=1 // pred_check_branch
      %84 = sbr.rel (0) target = $region29
    $region28: #{tpu_custom_call.1} parent=1 // pred_region
      _
    $region29: #{tpu_custom_call.1} parent=1 // pred_fallthru
      _
    // Predicated region
    $region30: #{tpu_custom_call.1} parent=1 // pred_check
      _
    $region31: #{tpu_custom_call.1} parent=1 // pred_check_branch
      %86 = sbr.rel (0) target = $region33
    $region32: #{tpu_custom_call.1} parent=1 // pred_region
      %88 = dma.done [#allocation3], 1024
    $region33: #{tpu_custom_call.1} parent=1 // pred_fallthru
      _
    // Predicated region
    $region34: #{tpu_custom_call.1} parent=1 // pred_check
      _
    $region35: #{tpu_custom_call.1} parent=1 // pred_check_branch
      %90 = sbr.rel (0) target = $region37
    $region36: #{tpu_custom_call.1} parent=1 // pred_region
      %92 = dma.done [#allocation6], 512
    $region37: #{tpu_custom_call.1} parent=1 // pred_fallthru
      _
    // Predicated region
    $region38: #{tpu_custom_call.1} parent=1 // pred_check
      _
    $region39: #{tpu_custom_call.1} parent=1 // pred_check_branch
      %94 = sbr.rel (0) target = $region41
    $region40: #{tpu_custom_call.1} parent=1 // pred_region
      %96 = dma.done [#allocation6], 512
    $region41: #{tpu_custom_call.1} parent=1 // pred_fallthru
      _
    // Predicated region
    $region42: #{tpu_custom_call.1} parent=1 // pred_check
      _
    $region43: #{tpu_custom_call.1} parent=1 // pred_check_branch
      %98 = sbr.rel (0) target = $region45
    $region44: #{tpu_custom_call.1} parent=1 // pred_region
      %100 = dma.done [#allocation9], 512
    $region45: #{tpu_custom_call.1} parent=1 // pred_fallthru
      _
    // Predicated region
    $region46: #{tpu_custom_call.1} parent=1 // pred_check
      _
    $region47: #{tpu_custom_call.1} parent=1 // pred_check_branch
      %102 = sbr.rel (0) target = $region49
    $region48: #{tpu_custom_call.1} parent=1 // pred_region
      %104 = dma.done [#allocation9], 512
    $region49: #{tpu_custom_call.1} parent=1 // pred_fallthru
      _
    %v105 = vld [vmem:[#allocation5] sm:$0xff]
    %v106 = vld [vmem:[#allocation5 + $0x8] sm:$0xff]
    %v107 = vld [vmem:[#allocation5 + $0x10] sm:$0xff]
    %v108 = vld [vmem:[#allocation5 + $0x18] sm:$0xff]
    %v109 = vld [vmem:[#allocation7] sm:$0xff]
    %v110 = vld [vmem:[#allocation7 + $0x8] sm:$0xff]
    %v111 = vld [vmem:[#allocation7 + $0x10] sm:$0xff]
    %v112 = vld [vmem:[#allocation7 + $0x18] sm:$0xff]
    %v113 = vld [vmem:[#allocation8] sm:$0xff]
    %v114 = vld [vmem:[#allocation8 + $0x8] sm:$0xff]
    %v115 = vld [vmem:[#allocation8 + $0x10] sm:$0xff]
    %v116 = vld [vmem:[#allocation8 + $0x18] sm:$0xff]
    %v117 = vld [vmem:[%s4] sm:$0x1]
    %v118 = vld [vmem:[#allocation2] sm:$0xff]
    %v119 = vxor.u32 %v118, 2147483648
    %v120 = vmul.f32 %v119, 1.442695
    %v121 = vpow.pop %v120
    %v122 = vadd.f32 %v121, 1.0
    %v123 = vrcp.pop %v122
    %v124 = vmul.f32 %v122, %v123
    %v125 = vsub.f32 1.0, %v124
    %v126 = vmul.f32 %v123, %v125
    %v127 = vadd.f32 %v123, %v126
    %vm128 = vweird.f32 %v122
    %vm129 = vweird.f32 %v123
    %vm130 = vmor %vm128, %vm129
    %v131 = vsel %vm130, %v123, %v127
    %v132 = vand.u32 2147483647, %v122
    %vm133 = vcmp.eq.f32.partialorder %v132, 8.507059e+37
    %v134 = vand.u32 %v122, 2147483648
    %v135 = vor.u32 1.1754944e-38, %v134
    %v136 = vsel %vm133, %v135, %v131
    %v137 = vmul.f32 1.0, %v136
    %v138 = vtanh.pop %v118
    %v139 = vmul.f32 %v137, 0.0
    %141 = vrot.lane.b32.xlu0 %v138, 64
    %v142 = vpop.permute.xlu0 %141
    %v144 = vmul.f32 %v137, %v142
    %146 = vrot.lane.b32.xlu0 %v144, 32
    %v147 = vpop.permute.xlu0 %146
    %v149 = vadd.f32 %v139, %v147
    %v150 = vtanh.pop %v149
    %152 = vrot.lane.b32.xlu0 %v150, 64
    %v153 = vpop.permute.xlu0 %152
    %v155 = vmul.f32 %v137, %v153
    %s156 = scalar_lea.vmem [#allocation2], 8
    %v157 = vld [vmem:[%s156] sm:$0xff]
    %159 = vrot.lane.b32.xlu0 %v155, 32
    %v160 = vpop.permute.xlu0 %159
    %vm161 = vcmask 261120
    %v162 = vsel %vm161, %v160, 0
    %164 = vmatpush.msra.mxu0 0.0
    %165 = vmatpush.msra.mxu0 0.0
    %166 = vmatpush.msra.mxu0 0.0
    %167 = vmatpush.msra.mxu0 0.0
    %168 = vmatpush.msra.mxu0 0.0
    %169 = vmatpush.msra.mxu0 0.0
    %170 = vmatpush.msra.mxu0 0.0
    %171 = vmatpush.msra.mxu0 0.0
    %172 = vmatpush.msra.mxu0 0.0
    %173 = vmatpush.msra.mxu0 0.0
    %174 = vmatpush.msra.mxu0 0.0
    %175 = vmatpush.msra.mxu0 0.0
    %176 = vmatpush.msra.mxu0 %v108
    %177 = vmatpush.msra.mxu0 %v107
    %178 = vmatpush.msra.mxu0 %v106
    %179 = vmatpush.msra.mxu0 %v105
    %180 = vmatmul.f32.gmra.mxu0 %v162
    %v181 = vpop.f32.mrf.mxu0
    %v182 = vadd.f32 0.0, %v181
    %183 = vdwg.mxu0
    %v184 = vadd.f32 %v157, %v182
    %v186 = vsel %vm161, 0.0, 0
    %188 = vmatpush.msra.mxu0 0.0
    %189 = vmatpush.msra.mxu0 0.0
    %190 = vmatpush.msra.mxu0 0.0
    %191 = vmatpush.msra.mxu0 0.0
    %192 = vmatpush.msra.mxu0 0.0
    %193 = vmatpush.msra.mxu0 0.0
    %194 = vmatpush.msra.mxu0 0.0
    %195 = vmatpush.msra.mxu0 0.0
    %196 = vmatpush.msra.mxu0 0.0
    %197 = vmatpush.msra.mxu0 0.0
    %198 = vmatpush.msra.mxu0 0.0
    %199 = vmatpush.msra.mxu0 0.0
    %200 = vmatpush.msra.mxu0 %v116
    %201 = vmatpush.msra.mxu0 %v115
    %202 = vmatpush.msra.mxu0 %v114
    %203 = vmatpush.msra.mxu0 %v113
    %204 = vmatmul.f32.gmra.mxu0 %v186
    %v205 = vpop.f32.mrf.mxu0
    %v206 = vadd.f32 0.0, %v205
    %207 = vdwg.mxu0
    %208 = vmatpush.msra.mxu0 0.0
    %209 = vmatpush.msra.mxu0 0.0
    %210 = vmatpush.msra.mxu0 0.0
    %211 = vmatpush.msra.mxu0 0.0
    %212 = vmatpush.msra.mxu0 0.0
    %213 = vmatpush.msra.mxu0 0.0
    %214 = vmatpush.msra.mxu0 0.0
    %215 = vmatpush.msra.mxu0 0.0
    %216 = vmatpush.msra.mxu0 0.0
    %217 = vmatpush.msra.mxu0 0.0
    %218 = vmatpush.msra.mxu0 0.0
    %219 = vmatpush.msra.mxu0 0.0
    %220 = vmatpush.msra.mxu0 %v112
    %221 = vmatpush.msra.mxu0 %v111
    %222 = vmatpush.msra.mxu0 %v110
    %223 = vmatpush.msra.mxu0 %v109
    %224 = vmatmul.f32.gmra.mxu0 %v162
    %v225 = vpop.f32.mrf.mxu0
    %v226 = vadd.f32 %v206, %v225
    %227 = vdwg.mxu0
    %v229 = vperm.slane %v117, 0
    %v231 = vadd.f32 %v226, %v229
    %v232 = vxor.u32 %v184, 2147483648
    %v233 = vmul.f32 %v232, 1.442695
    %v234 = vpow.pop %v233
    %v235 = vadd.f32 %v234, 1.0
    %v236 = vrcp.pop %v235
    %v237 = vmul.f32 %v235, %v236
    %v238 = vsub.f32 1.0, %v237
    %v239 = vmul.f32 %v236, %v238
    %v240 = vadd.f32 %v236, %v239
    %vm241 = vweird.f32 %v235
    %vm242 = vweird.f32 %v236
    %vm243 = vmor %vm241, %vm242
    %v244 = vsel %vm243, %v236, %v240
    %v245 = vand.u32 2147483647, %v235
    %vm246 = vcmp.eq.f32.partialorder %v245, 8.507059e+37
    %v247 = vand.u32 %v235, 2147483648
    %v248 = vor.u32 1.1754944e-38, %v247
    %v249 = vsel %vm246, %v248, %v244
    %v250 = vmul.f32 1.0, %v249
    %v251 = vtanh.pop %v184
    %v252 = vmul.f32 %v250, %v149
    %254 = vrot.lane.b32.xlu0 %v251, 64
    %v255 = vpop.permute.xlu0 %254
    %v257 = vmul.f32 %v250, %v255
    %259 = vrot.lane.b32.xlu0 %v257, 32
    %v260 = vpop.permute.xlu0 %259
    %v262 = vadd.f32 %v252, %v260
    %v263 = vtanh.pop %v262
    %265 = vrot.lane.b32.xlu0 %v263, 64
    %v266 = vpop.permute.xlu0 %265
    %v268 = vmul.f32 %v250, %v266
    %v269 = vxor.u32 %v231, 2147483648
    %v270 = vmul.f32 %v269, 1.442695
    %v271 = vpow.pop %v270
    %v272 = vadd.f32 %v271, 1.0
    %v273 = vrcp.pop %v272
    %v274 = vmul.f32 %v272, %v273
    %v275 = vsub.f32 1.0, %v274
    %v276 = vmul.f32 %v273, %v275
    %v277 = vadd.f32 %v273, %v276
    %vm278 = vweird.f32 %v272
    %vm279 = vweird.f32 %v273
    %vm280 = vmor %vm278, %vm279
    %v281 = vsel %vm280, %v273, %v277
    %v282 = vand.u32 2147483647, %v272
    %vm283 = vcmp.eq.f32.partialorder %v282, 8.507059e+37
    %v284 = vand.u32 %v272, 2147483648
    %v285 = vor.u32 1.1754944e-38, %v284
    %v286 = vsel %vm283, %v285, %v281
    %v287 = vmul.f32 1.0, %v286
    %v288 = vtanh.pop %v231
    %v289 = vmul.f32 %v287, 0.0
    %291 = vrot.lane.b32.xlu0 %v288, 64
    %v292 = vpop.permute.xlu0 %291
    %v294 = vmul.f32 %v287, %v292
    %296 = vrot.lane.b32.xlu0 %v294, 32
    %v297 = vpop.permute.xlu0 %296
    %v299 = vadd.f32 %v289, %v297
    %v300 = vtanh.pop %v299
    %302 = vrot.lane.b32.xlu0 %v300, 64
    %v303 = vpop.permute.xlu0 %302
    %v305 = vmul.f32 %v287, %v303
    %s306 = scalar_lea.vmem [#allocation2], 16
    %v307 = vld [vmem:[%s306] sm:$0xff]
    %309 = vrot.lane.b32.xlu0 %v268, 32
    %v310 = vpop.permute.xlu0 %309
    %v311 = vsel %vm161, %v310, 0
    %313 = vmatpush.msra.mxu0 0.0
    %314 = vmatpush.msra.mxu0 0.0
    %315 = vmatpush.msra.mxu0 0.0
    %316 = vmatpush.msra.mxu0 0.0
    %317 = vmatpush.msra.mxu0 0.0
    %318 = vmatpush.msra.mxu0 0.0
    %319 = vmatpush.msra.mxu0 0.0
    %320 = vmatpush.msra.mxu0 0.0
    %321 = vmatpush.msra.mxu0 0.0
    %322 = vmatpush.msra.mxu0 0.0
    %323 = vmatpush.msra.mxu0 0.0
    %324 = vmatpush.msra.mxu0 0.0
    %325 = vmatpush.msra.mxu0 %v108
    %326 = vmatpush.msra.mxu0 %v107
    %327 = vmatpush.msra.mxu0 %v106
    %328 = vmatpush.msra.mxu0 %v105
    %329 = vmatmul.f32.gmra.mxu0 %v311
    %v330 = vpop.f32.mrf.mxu0
    %v331 = vadd.f32 0.0, %v330
    %332 = vdwg.mxu0
    %v333 = vadd.f32 %v307, %v331
    %335 = vrot.lane.b32.xlu0 %v305, 32
    %v336 = vpop.permute.xlu0 %335
    %v337 = vsel %vm161, %v336, 0
    %339 = vmatpush.msra.mxu0 0.0
    %340 = vmatpush.msra.mxu0 0.0
    %341 = vmatpush.msra.mxu0 0.0
    %342 = vmatpush.msra.mxu0 0.0
    %343 = vmatpush.msra.mxu0 0.0
    %344 = vmatpush.msra.mxu0 0.0
    %345 = vmatpush.msra.mxu0 0.0
    %346 = vmatpush.msra.mxu0 0.0
    %347 = vmatpush.msra.mxu0 0.0
    %348 = vmatpush.msra.mxu0 0.0
    %349 = vmatpush.msra.mxu0 0.0
    %350 = vmatpush.msra.mxu0 0.0
    %351 = vmatpush.msra.mxu0 %v116
    %352 = vmatpush.msra.mxu0 %v115
    %353 = vmatpush.msra.mxu0 %v114
    %354 = vmatpush.msra.mxu0 %v113
    %355 = vmatmul.f32.gmra.mxu0 %v337
    %v356 = vpop.f32.mrf.mxu0
    %v357 = vadd.f32 0.0, %v356
    %358 = vdwg.mxu0
    %359 = vmatpush.msra.mxu0 0.0
    %360 = vmatpush.msra.mxu0 0.0
    %361 = vmatpush.msra.mxu0 0.0
    %362 = vmatpush.msra.mxu0 0.0
    %363 = vmatpush.msra.mxu0 0.0
    %364 = vmatpush.msra.mxu0 0.0
    %365 = vmatpush.msra.mxu0 0.0
    %366 = vmatpush.msra.mxu0 0.0
    %367 = vmatpush.msra.mxu0 0.0
    %368 = vmatpush.msra.mxu0 0.0
    %369 = vmatpush.msra.mxu0 0.0
    %370 = vmatpush.msra.mxu0 0.0
    %371 = vmatpush.msra.mxu0 %v112
    %372 = vmatpush.msra.mxu0 %v111
    %373 = vmatpush.msra.mxu0 %v110
    %374 = vmatpush.msra.mxu0 %v109
    %375 = vmatmul.f32.gmra.mxu0 %v311
    %v376 = vpop.f32.mrf.mxu0
    %v377 = vadd.f32 %v357, %v376
    %378 = vdwg.mxu0
    %v379 = vadd.f32 %v377, %v229
    %v380 = vxor.u32 %v333, 2147483648
    %v381 = vmul.f32 %v380, 1.442695
    %v382 = vpow.pop %v381
    %v383 = vadd.f32 %v382, 1.0
    %v384 = vrcp.pop %v383
    %v385 = vmul.f32 %v383, %v384
    %v386 = vsub.f32 1.0, %v385
    %v387 = vmul.f32 %v384, %v386
    %v388 = vadd.f32 %v384, %v387
    %vm389 = vweird.f32 %v383
    %vm390 = vweird.f32 %v384
    %vm391 = vmor %vm389, %vm390
    %v392 = vsel %vm391, %v384, %v388
    %v393 = vand.u32 2147483647, %v383
    %vm394 = vcmp.eq.f32.partialorder %v393, 8.507059e+37
    %v395 = vand.u32 %v383, 2147483648
    %v396 = vor.u32 1.1754944e-38, %v395
    %v397 = vsel %vm394, %v396, %v392
    %v398 = vmul.f32 1.0, %v397
    %v399 = vtanh.pop %v333
    %v400 = vmul.f32 %v398, %v262
    %402 = vrot.lane.b32.xlu0 %v399, 64
    %v403 = vpop.permute.xlu0 %402
    %v405 = vmul.f32 %v398, %v403
    %407 = vrot.lane.b32.xlu0 %v405, 32
    %v408 = vpop.permute.xlu0 %407
    %v410 = vadd.f32 %v400, %v408
    %v411 = vtanh.pop %v410
    %413 = vrot.lane.b32.xlu0 %v411, 64
    %v414 = vpop.permute.xlu0 %413
    %v416 = vmul.f32 %v398, %v414
    %v417 = vxor.u32 %v379, 2147483648
    %v418 = vmul.f32 %v417, 1.442695
    %v419 = vpow.pop %v418
    %v420 = vadd.f32 %v419, 1.0
    %v421 = vrcp.pop %v420
    %v422 = vmul.f32 %v420, %v421
    %v423 = vsub.f32 1.0, %v422
    %v424 = vmul.f32 %v421, %v423
    %v425 = vadd.f32 %v421, %v424
    %vm426 = vweird.f32 %v420
    %vm427 = vweird.f32 %v421
    %vm428 = vmor %vm426, %vm427
    %v429 = vsel %vm428, %v421, %v425
    %v430 = vand.u32 2147483647, %v420
    %vm431 = vcmp.eq.f32.partialorder %v430, 8.507059e+37
    %v432 = vand.u32 %v420, 2147483648
    %v433 = vor.u32 1.1754944e-38, %v432
    %v434 = vsel %vm431, %v433, %v429
    %v435 = vmul.f32 1.0, %v434
    %v436 = vtanh.pop %v379
    %v437 = vmul.f32 %v435, %v299
    %439 = vrot.lane.b32.xlu0 %v436, 64
    %v440 = vpop.permute.xlu0 %439
    %v442 = vmul.f32 %v435, %v440
    %444 = vrot.lane.b32.xlu0 %v442, 32
    %v445 = vpop.permute.xlu0 %444
    %v447 = vadd.f32 %v437, %v445
    %v448 = vtanh.pop %v447
    %450 = vrot.lane.b32.xlu0 %v448, 64
    %v451 = vpop.permute.xlu0 %450
    %v453 = vmul.f32 %v435, %v451
    %s454 = scalar_lea.vmem [#allocation2], 24
    %v455 = vld [vmem:[%s454] sm:$0xff]
    %457 = vrot.lane.b32.xlu0 %v416, 32
    %v458 = vpop.permute.xlu0 %457
    %v459 = vsel %vm161, %v458, 0
    %461 = vmatpush.msra.mxu0 0.0
    %462 = vmatpush.msra.mxu0 0.0
    %463 = vmatpush.msra.mxu0 0.0
    %464 = vmatpush.msra.mxu0 0.0
    %465 = vmatpush.msra.mxu0 0.0
    %466 = vmatpush.msra.mxu0 0.0
    %467 = vmatpush.msra.mxu0 0.0
    %468 = vmatpush.msra.mxu0 0.0
    %469 = vmatpush.msra.mxu0 0.0
    %470 = vmatpush.msra.mxu0 0.0
    %471 = vmatpush.msra.mxu0 0.0
    %472 = vmatpush.msra.mxu0 0.0
    %473 = vmatpush.msra.mxu0 %v108
    %474 = vmatpush.msra.mxu0 %v107
    %475 = vmatpush.msra.mxu0 %v106
    %476 = vmatpush.msra.mxu0 %v105
    %477 = vmatmul.f32.gmra.mxu0 %v459
    %v478 = vpop.f32.mrf.mxu0
    %v479 = vadd.f32 0.0, %v478
    %480 = vdwg.mxu0
    %v481 = vadd.f32 %v455, %v479
    %483 = vrot.lane.b32.xlu0 %v453, 32
    %v484 = vpop.permute.xlu0 %483
    %v485 = vsel %vm161, %v484, 0
    %487 = vmatpush.msra.mxu0 0.0
    %488 = vmatpush.msra.mxu0 0.0
    %489 = vmatpush.msra.mxu0 0.0
    %490 = vmatpush.msra.mxu0 0.0
    %491 = vmatpush.msra.mxu0 0.0
    %492 = vmatpush.msra.mxu0 0.0
    %493 = vmatpush.msra.mxu0 0.0
    %494 = vmatpush.msra.mxu0 0.0
    %495 = vmatpush.msra.mxu0 0.0
    %496 = vmatpush.msra.mxu0 0.0
    %497 = vmatpush.msra.mxu0 0.0
    %498 = vmatpush.msra.mxu0 0.0
    %499 = vmatpush.msra.mxu0 %v116
    %500 = vmatpush.msra.mxu0 %v115
    %501 = vmatpush.msra.mxu0 %v114
    %502 = vmatpush.msra.mxu0 %v113
    %503 = vmatmul.f32.gmra.mxu0 %v485
    %v504 = vpop.f32.mrf.mxu0
    %v505 = vadd.f32 0.0, %v504
    %506 = vdwg.mxu0
    %507 = vmatpush.msra.mxu0 0.0
    %508 = vmatpush.msra.mxu0 0.0
    %509 = vmatpush.msra.mxu0 0.0
    %510 = vmatpush.msra.mxu0 0.0
    %511 = vmatpush.msra.mxu0 0.0
    %512 = vmatpush.msra.mxu0 0.0
    %513 = vmatpush.msra.mxu0 0.0
    %514 = vmatpush.msra.mxu0 0.0
    %515 = vmatpush.msra.mxu0 0.0
    %516 = vmatpush.msra.mxu0 0.0
    %517 = vmatpush.msra.mxu0 0.0
    %518 = vmatpush.msra.mxu0 0.0
    %519 = vmatpush.msra.mxu0 %v112
    %520 = vmatpush.msra.mxu0 %v111
    %521 = vmatpush.msra.mxu0 %v110
    %522 = vmatpush.msra.mxu0 %v109
    %523 = vmatmul.f32.gmra.mxu0 %v459
    %v524 = vpop.f32.mrf.mxu0
    %v525 = vadd.f32 %v505, %v524
    %526 = vdwg.mxu0
    %v527 = vadd.f32 %v525, %v229
    %v528 = vxor.u32 %v481, 2147483648
    %v529 = vmul.f32 %v528, 1.442695
    %v530 = vpow.pop %v529
    %v531 = vadd.f32 %v530, 1.0
    %v532 = vrcp.pop %v531
    %v533 = vmul.f32 %v531, %v532
    %v534 = vsub.f32 1.0, %v533
    %v535 = vmul.f32 %v532, %v534
    %v536 = vadd.f32 %v532, %v535
    %vm537 = vweird.f32 %v531
    %vm538 = vweird.f32 %v532
    %vm539 = vmor %vm537, %vm538
    %v540 = vsel %vm539, %v532, %v536
    %v541 = vand.u32 2147483647, %v531
    %vm542 = vcmp.eq.f32.partialorder %v541, 8.507059e+37
    %v543 = vand.u32 %v531, 2147483648
    %v544 = vor.u32 1.1754944e-38, %v543
    %v545 = vsel %vm542, %v544, %v540
    %v546 = vmul.f32 1.0, %v545
    %v547 = vtanh.pop %v481
    %v548 = vmul.f32 %v546, %v410
    %550 = vrot.lane.b32.xlu0 %v547, 64
    %v551 = vpop.permute.xlu0 %550
    %v553 = vmul.f32 %v546, %v551
    %555 = vrot.lane.b32.xlu0 %v553, 32
    %v556 = vpop.permute.xlu0 %555
    %v558 = vadd.f32 %v548, %v556
    %v559 = vtanh.pop %v558
    %561 = vrot.lane.b32.xlu0 %v559, 64
    %v562 = vpop.permute.xlu0 %561
    %v564 = vmul.f32 %v546, %v562
    %v565 = vxor.u32 %v527, 2147483648
    %v566 = vmul.f32 %v565, 1.442695
    %v567 = vpow.pop %v566
    %v568 = vadd.f32 %v567, 1.0
    %v569 = vrcp.pop %v568
    %v570 = vmul.f32 %v568, %v569
    %v571 = vsub.f32 1.0, %v570
    %v572 = vmul.f32 %v569, %v571
    %v573 = vadd.f32 %v569, %v572
    %vm574 = vweird.f32 %v568
    %vm575 = vweird.f32 %v569
    %vm576 = vmor %vm574, %vm575
    %v577 = vsel %vm576, %v569, %v573
    %v578 = vand.u32 2147483647, %v568
    %vm579 = vcmp.eq.f32.partialorder %v578, 8.507059e+37
    %v580 = vand.u32 %v568, 2147483648
    %v581 = vor.u32 1.1754944e-38, %v580
    %v582 = vsel %vm579, %v581, %v577
    %v583 = vmul.f32 1.0, %v582
    %v584 = vtanh.pop %v527
    %v585 = vmul.f32 %v583, %v447
    %587 = vrot.lane.b32.xlu0 %v584, 64
    %v588 = vpop.permute.xlu0 %587
    %v590 = vmul.f32 %v583, %v588
    %592 = vrot.lane.b32.xlu0 %v590, 32
    %v593 = vpop.permute.xlu0 %592
    %v595 = vadd.f32 %v585, %v593
    %v596 = vtanh.pop %v595
    %598 = vrot.lane.b32.xlu0 %v596, 64
    %v599 = vpop.permute.xlu0 %598
    %v601 = vmul.f32 %v583, %v599
    %s602 = scalar_lea.vmem [#allocation2], 32
    %v603 = vld [vmem:[%s602] sm:$0xff]
    %605 = vrot.lane.b32.xlu0 %v564, 32
    %v606 = vpop.permute.xlu0 %605
    %v607 = vsel %vm161, %v606, 0
    %609 = vmatpush.msra.mxu0 0.0
    %610 = vmatpush.msra.mxu0 0.0
    %611 = vmatpush.msra.mxu0 0.0
    %612 = vmatpush.msra.mxu0 0.0
    %613 = vmatpush.msra.mxu0 0.0
    %614 = vmatpush.msra.mxu0 0.0
    %615 = vmatpush.msra.mxu0 0.0
    %616 = vmatpush.msra.mxu0 0.0
    %617 = vmatpush.msra.mxu0 0.0
    %618 = vmatpush.msra.mxu0 0.0
    %619 = vmatpush.msra.mxu0 0.0
    %620 = vmatpush.msra.mxu0 0.0
    %621 = vmatpush.msra.mxu0 %v108
    %622 = vmatpush.msra.mxu0 %v107
    %623 = vmatpush.msra.mxu0 %v106
    %624 = vmatpush.msra.mxu0 %v105
    %625 = vmatmul.f32.gmra.mxu0 %v607
    %v626 = vpop.f32.mrf.mxu0
    %v627 = vadd.f32 0.0, %v626
    %628 = vdwg.mxu0
    %v629 = vadd.f32 %v603, %v627
    %631 = vrot.lane.b32.xlu0 %v601, 32
    %v632 = vpop.permute.xlu0 %631
    %v633 = vsel %vm161, %v632, 0
    %635 = vmatpush.msra.mxu0 0.0
    %636 = vmatpush.msra.mxu0 0.0
    %637 = vmatpush.msra.mxu0 0.0
    %638 = vmatpush.msra.mxu0 0.0
    %639 = vmatpush.msra.mxu0 0.0
    %640 = vmatpush.msra.mxu0 0.0
    %641 = vmatpush.msra.mxu0 0.0
    %642 = vmatpush.msra.mxu0 0.0
    %643 = vmatpush.msra.mxu0 0.0
    %644 = vmatpush.msra.mxu0 0.0
    %645 = vmatpush.msra.mxu0 0.0
    %646 = vmatpush.msra.mxu0 0.0
    %647 = vmatpush.msra.mxu0 %v116
    %648 = vmatpush.msra.mxu0 %v115
    %649 = vmatpush.msra.mxu0 %v114
    %650 = vmatpush.msra.mxu0 %v113
    %651 = vmatmul.f32.gmra.mxu0 %v633
    %v652 = vpop.f32.mrf.mxu0
    %v653 = vadd.f32 0.0, %v652
    %654 = vdwg.mxu0
    %655 = vmatpush.msra.mxu0 0.0
    %656 = vmatpush.msra.mxu0 0.0
    %657 = vmatpush.msra.mxu0 0.0
    %658 = vmatpush.msra.mxu0 0.0
    %659 = vmatpush.msra.mxu0 0.0
    %660 = vmatpush.msra.mxu0 0.0
    %661 = vmatpush.msra.mxu0 0.0
    %662 = vmatpush.msra.mxu0 0.0
    %663 = vmatpush.msra.mxu0 0.0
    %664 = vmatpush.msra.mxu0 0.0
    %665 = vmatpush.msra.mxu0 0.0
    %666 = vmatpush.msra.mxu0 0.0
    %667 = vmatpush.msra.mxu0 %v112
    %668 = vmatpush.msra.mxu0 %v111
    %669 = vmatpush.msra.mxu0 %v110
    %670 = vmatpush.msra.mxu0 %v109
    %671 = vmatmul.f32.gmra.mxu0 %v607
    %v672 = vpop.f32.mrf.mxu0
    %v673 = vadd.f32 %v653, %v672
    %674 = vdwg.mxu0
    %v675 = vadd.f32 %v673, %v229
    %v676 = vxor.u32 %v629, 2147483648
    %v677 = vmul.f32 %v676, 1.442695
    %v678 = vpow.pop %v677
    %v679 = vadd.f32 %v678, 1.0
    %v680 = vrcp.pop %v679
    %v681 = vmul.f32 %v679, %v680
    %v682 = vsub.f32 1.0, %v681
    %v683 = vmul.f32 %v680, %v682
    %v684 = vadd.f32 %v680, %v683
    %vm685 = vweird.f32 %v679
    %vm686 = vweird.f32 %v680
    %vm687 = vmor %vm685, %vm686
    %v688 = vsel %vm687, %v680, %v684
    %v689 = vand.u32 2147483647, %v679
    %vm690 = vcmp.eq.f32.partialorder %v689, 8.507059e+37
    %v691 = vand.u32 %v679, 2147483648
    %v692 = vor.u32 1.1754944e-38, %v691
    %v693 = vsel %vm690, %v692, %v688
    %v694 = vmul.f32 1.0, %v693
    %v695 = vtanh.pop %v629
    %v696 = vmul.f32 %v694, %v558
    %698 = vrot.lane.b32.xlu0 %v695, 64
    %v699 = vpop.permute.xlu0 %698
    %v701 = vmul.f32 %v694, %v699
    %703 = vrot.lane.b32.xlu0 %v701, 32
    %v704 = vpop.permute.xlu0 %703
    %v706 = vadd.f32 %v696, %v704
    %v707 = vtanh.pop %v706
    %709 = vrot.lane.b32.xlu0 %v707, 64
    %v710 = vpop.permute.xlu0 %709
    %v712 = vmul.f32 %v694, %v710
    %v713 = vxor.u32 %v675, 2147483648
    %v714 = vmul.f32 %v713, 1.442695
    %v715 = vpow.pop %v714
    %v716 = vadd.f32 %v715, 1.0
    %v717 = vrcp.pop %v716
    %v718 = vmul.f32 %v716, %v717
    %v719 = vsub.f32 1.0, %v718
    %v720 = vmul.f32 %v717, %v719
    %v721 = vadd.f32 %v717, %v720
    %vm722 = vweird.f32 %v716
    %vm723 = vweird.f32 %v717
    %vm724 = vmor %vm722, %vm723
    %v725 = vsel %vm724, %v717, %v721
    %v726 = vand.u32 2147483647, %v716
    %vm727 = vcmp.eq.f32.partialorder %v726, 8.507059e+37
    %v728 = vand.u32 %v716, 2147483648
    %v729 = vor.u32 1.1754944e-38, %v728
    %v730 = vsel %vm727, %v729, %v725
    %v731 = vmul.f32 1.0, %v730
    %v732 = vtanh.pop %v675
    %v733 = vmul.f32 %v731, %v595
    %735 = vrot.lane.b32.xlu0 %v732, 64
    %v736 = vpop.permute.xlu0 %735
    %v738 = vmul.f32 %v731, %v736
    %740 = vrot.lane.b32.xlu0 %v738, 32
    %v741 = vpop.permute.xlu0 %740
    %v743 = vadd.f32 %v733, %v741
    %v744 = vtanh.pop %v743
    %746 = vrot.lane.b32.xlu0 %v744, 64
    %v747 = vpop.permute.xlu0 %746
    %v749 = vmul.f32 %v731, %v747
    %s750 = scalar_lea.vmem [#allocation2], 40
    %v751 = vld [vmem:[%s750] sm:$0xff]
    %753 = vrot.lane.b32.xlu0 %v712, 32
    %v754 = vpop.permute.xlu0 %753
    %v755 = vsel %vm161, %v754, 0
    %757 = vmatpush.msra.mxu0 0.0
    %758 = vmatpush.msra.mxu0 0.0
    %759 = vmatpush.msra.mxu0 0.0
    %760 = vmatpush.msra.mxu0 0.0
    %761 = vmatpush.msra.mxu0 0.0
    %762 = vmatpush.msra.mxu0 0.0
    %763 = vmatpush.msra.mxu0 0.0
    %764 = vmatpush.msra.mxu0 0.0
    %765 = vmatpush.msra.mxu0 0.0
    %766 = vmatpush.msra.mxu0 0.0
    %767 = vmatpush.msra.mxu0 0.0
    %768 = vmatpush.msra.mxu0 0.0
    %769 = vmatpush.msra.mxu0 %v108
    %770 = vmatpush.msra.mxu0 %v107
    %771 = vmatpush.msra.mxu0 %v106
    %772 = vmatpush.msra.mxu0 %v105
    %773 = vmatmul.f32.gmra.mxu0 %v755
    %v774 = vpop.f32.mrf.mxu0
    %v775 = vadd.f32 0.0, %v774
    %776 = vdwg.mxu0
    %v777 = vadd.f32 %v751, %v775
    %779 = vrot.lane.b32.xlu0 %v749, 32
    %v780 = vpop.permute.xlu0 %779
    %v781 = vsel %vm161, %v780, 0
    %783 = vmatpush.msra.mxu0 0.0
    %784 = vmatpush.msra.mxu0 0.0
    %785 = vmatpush.msra.mxu0 0.0
    %786 = vmatpush.msra.mxu0 0.0
    %787 = vmatpush.msra.mxu0 0.0
    %788 = vmatpush.msra.mxu0 0.0
    %789 = vmatpush.msra.mxu0 0.0
    %790 = vmatpush.msra.mxu0 0.0
    %791 = vmatpush.msra.mxu0 0.0
    %792 = vmatpush.msra.mxu0 0.0
    %793 = vmatpush.msra.mxu0 0.0
    %794 = vmatpush.msra.mxu0 0.0
    %795 = vmatpush.msra.mxu0 %v116
    %796 = vmatpush.msra.mxu0 %v115
    %797 = vmatpush.msra.mxu0 %v114
    %798 = vmatpush.msra.mxu0 %v113
    %799 = vmatmul.f32.gmra.mxu0 %v781
    %v800 = vpop.f32.mrf.mxu0
    %v801 = vadd.f32 0.0, %v800
    %802 = vdwg.mxu0
    %803 = vmatpush.msra.mxu0 0.0
    %804 = vmatpush.msra.mxu0 0.0
    %805 = vmatpush.msra.mxu0 0.0
    %806 = vmatpush.msra.mxu0 0.0
    %807 = vmatpush.msra.mxu0 0.0
    %808 = vmatpush.msra.mxu0 0.0
    %809 = vmatpush.msra.mxu0 0.0
    %810 = vmatpush.msra.mxu0 0.0
    %811 = vmatpush.msra.mxu0 0.0
    %812 = vmatpush.msra.mxu0 0.0
    %813 = vmatpush.msra.mxu0 0.0
    %814 = vmatpush.msra.mxu0 0.0
    %815 = vmatpush.msra.mxu0 %v112
    %816 = vmatpush.msra.mxu0 %v111
    %817 = vmatpush.msra.mxu0 %v110
    %818 = vmatpush.msra.mxu0 %v109
    %819 = vmatmul.f32.gmra.mxu0 %v755
    %v820 = vpop.f32.mrf.mxu0
    %v821 = vadd.f32 %v801, %v820
    %822 = vdwg.mxu0
    %v823 = vadd.f32 %v821, %v229
    %v824 = vxor.u32 %v777, 2147483648
    %v825 = vmul.f32 %v824, 1.442695
    %v826 = vpow.pop %v825
    %v827 = vadd.f32 %v826, 1.0
    %v828 = vrcp.pop %v827
    %v829 = vmul.f32 %v827, %v828
    %v830 = vsub.f32 1.0, %v829
    %v831 = vmul.f32 %v828, %v830
    %v832 = vadd.f32 %v828, %v831
    %vm833 = vweird.f32 %v827
    %vm834 = vweird.f32 %v828
    %vm835 = vmor %vm833, %vm834
    %v836 = vsel %vm835, %v828, %v832
    %v837 = vand.u32 2147483647, %v827
    %vm838 = vcmp.eq.f32.partialorder %v837, 8.507059e+37
    %v839 = vand.u32 %v827, 2147483648
    %v840 = vor.u32 1.1754944e-38, %v839
    %v841 = vsel %vm838, %v840, %v836
    %v842 = vmul.f32 1.0, %v841
    %v843 = vtanh.pop %v777
    %v844 = vmul.f32 %v842, %v706
    %846 = vrot.lane.b32.xlu0 %v843, 64
    %v847 = vpop.permute.xlu0 %846
    %v849 = vmul.f32 %v842, %v847
    %851 = vrot.lane.b32.xlu0 %v849, 32
    %v852 = vpop.permute.xlu0 %851
    %v854 = vadd.f32 %v844, %v852
    %v855 = vtanh.pop %v854
    %857 = vrot.lane.b32.xlu0 %v855, 64
    %v858 = vpop.permute.xlu0 %857
    %v860 = vmul.f32 %v842, %v858
    %v861 = vxor.u32 %v823, 2147483648
    %v862 = vmul.f32 %v861, 1.442695
    %v863 = vpow.pop %v862
    %v864 = vadd.f32 %v863, 1.0
    %v865 = vrcp.pop %v864
    %v866 = vmul.f32 %v864, %v865
    %v867 = vsub.f32 1.0, %v866
    %v868 = vmul.f32 %v865, %v867
    %v869 = vadd.f32 %v865, %v868
    %vm870 = vweird.f32 %v864
    %vm871 = vweird.f32 %v865
    %vm872 = vmor %vm870, %vm871
    %v873 = vsel %vm872, %v865, %v869
    %v874 = vand.u32 2147483647, %v864
    %vm875 = vcmp.eq.f32.partialorder %v874, 8.507059e+37
    %v876 = vand.u32 %v864, 2147483648
    %v877 = vor.u32 1.1754944e-38, %v876
    %v878 = vsel %vm875, %v877, %v873
    %v879 = vmul.f32 1.0, %v878
    %v880 = vtanh.pop %v823
    %v881 = vmul.f32 %v879, %v743
    %883 = vrot.lane.b32.xlu0 %v880, 64
    %v884 = vpop.permute.xlu0 %883
    %v886 = vmul.f32 %v879, %v884
    %888 = vrot.lane.b32.xlu0 %v886, 32
    %v889 = vpop.permute.xlu0 %888
    %v891 = vadd.f32 %v881, %v889
    %v892 = vtanh.pop %v891
    %894 = vrot.lane.b32.xlu0 %v892, 64
    %v895 = vpop.permute.xlu0 %894
    %v897 = vmul.f32 %v879, %v895
    %s898 = scalar_lea.vmem [#allocation2], 48
    %v899 = vld [vmem:[%s898] sm:$0xff]
    %901 = vrot.lane.b32.xlu0 %v860, 32
    %v902 = vpop.permute.xlu0 %901
    %v903 = vsel %vm161, %v902, 0
    %905 = vmatpush.msra.mxu0 0.0
    %906 = vmatpush.msra.mxu0 0.0
    %907 = vmatpush.msra.mxu0 0.0
    %908 = vmatpush.msra.mxu0 0.0
    %909 = vmatpush.msra.mxu0 0.0
    %910 = vmatpush.msra.mxu0 0.0
    %911 = vmatpush.msra.mxu0 0.0
    %912 = vmatpush.msra.mxu0 0.0
    %913 = vmatpush.msra.mxu0 0.0
    %914 = vmatpush.msra.mxu0 0.0
    %915 = vmatpush.msra.mxu0 0.0
    %916 = vmatpush.msra.mxu0 0.0
    %917 = vmatpush.msra.mxu0 %v108
    %918 = vmatpush.msra.mxu0 %v107
    %919 = vmatpush.msra.mxu0 %v106
    %920 = vmatpush.msra.mxu0 %v105
    %921 = vmatmul.f32.gmra.mxu0 %v903
    %v922 = vpop.f32.mrf.mxu0
    %v923 = vadd.f32 0.0, %v922
    %924 = vdwg.mxu0
    %v925 = vadd.f32 %v899, %v923
    %927 = vrot.lane.b32.xlu0 %v897, 32
    %v928 = vpop.permute.xlu0 %927
    %v929 = vsel %vm161, %v928, 0
    %931 = vmatpush.msra.mxu0 0.0
    %932 = vmatpush.msra.mxu0 0.0
    %933 = vmatpush.msra.mxu0 0.0
    %934 = vmatpush.msra.mxu0 0.0
    %935 = vmatpush.msra.mxu0 0.0
    %936 = vmatpush.msra.mxu0 0.0
    %937 = vmatpush.msra.mxu0 0.0
    %938 = vmatpush.msra.mxu0 0.0
    %939 = vmatpush.msra.mxu0 0.0
    %940 = vmatpush.msra.mxu0 0.0
    %941 = vmatpush.msra.mxu0 0.0
    %942 = vmatpush.msra.mxu0 0.0
    %943 = vmatpush.msra.mxu0 %v116
    %944 = vmatpush.msra.mxu0 %v115
    %945 = vmatpush.msra.mxu0 %v114
    %946 = vmatpush.msra.mxu0 %v113
    %947 = vmatmul.f32.gmra.mxu0 %v929
    %v948 = vpop.f32.mrf.mxu0
    %v949 = vadd.f32 0.0, %v948
    %950 = vdwg.mxu0
    %951 = vmatpush.msra.mxu0 0.0
    %952 = vmatpush.msra.mxu0 0.0
    %953 = vmatpush.msra.mxu0 0.0
    %954 = vmatpush.msra.mxu0 0.0
    %955 = vmatpush.msra.mxu0 0.0
    %956 = vmatpush.msra.mxu0 0.0
    %957 = vmatpush.msra.mxu0 0.0
    %958 = vmatpush.msra.mxu0 0.0
    %959 = vmatpush.msra.mxu0 0.0
    %960 = vmatpush.msra.mxu0 0.0
    %961 = vmatpush.msra.mxu0 0.0
    %962 = vmatpush.msra.mxu0 0.0
    %963 = vmatpush.msra.mxu0 %v112
    %964 = vmatpush.msra.mxu0 %v111
    %965 = vmatpush.msra.mxu0 %v110
    %966 = vmatpush.msra.mxu0 %v109
    %967 = vmatmul.f32.gmra.mxu0 %v903
    %v968 = vpop.f32.mrf.mxu0
    %v969 = vadd.f32 %v949, %v968
    %970 = vdwg.mxu0
    %v971 = vadd.f32 %v969, %v229
    %v972 = vxor.u32 %v925, 2147483648
    %v973 = vmul.f32 %v972, 1.442695
    %v974 = vpow.pop %v973
    %v975 = vadd.f32 %v974, 1.0
    %v976 = vrcp.pop %v975
    %v977 = vmul.f32 %v975, %v976
    %v978 = vsub.f32 1.0, %v977
    %v979 = vmul.f32 %v976, %v978
    %v980 = vadd.f32 %v976, %v979
    %vm981 = vweird.f32 %v975
    %vm982 = vweird.f32 %v976
    %vm983 = vmor %vm981, %vm982
    %v984 = vsel %vm983, %v976, %v980
    %v985 = vand.u32 2147483647, %v975
    %vm986 = vcmp.eq.f32.partialorder %v985, 8.507059e+37
    %v987 = vand.u32 %v975, 2147483648
    %v988 = vor.u32 1.1754944e-38, %v987
    %v989 = vsel %vm986, %v988, %v984
    %v990 = vmul.f32 1.0, %v989
    %v991 = vtanh.pop %v925
    %v992 = vmul.f32 %v990, %v854
    %994 = vrot.lane.b32.xlu0 %v991, 64
    %v995 = vpop.permute.xlu0 %994
    %v997 = vmul.f32 %v990, %v995
    %999 = vrot.lane.b32.xlu0 %v997, 32
    %v1000 = vpop.permute.xlu0 %999
    %v1002 = vadd.f32 %v992, %v1000
    %v1003 = vtanh.pop %v1002
    %1005 = vrot.lane.b32.xlu0 %v1003, 64
    %v1006 = vpop.permute.xlu0 %1005
    %v1008 = vmul.f32 %v990, %v1006
    %v1009 = vxor.u32 %v971, 2147483648
    %v1010 = vmul.f32 %v1009, 1.442695
    %v1011 = vpow.pop %v1010
    %v1012 = vadd.f32 %v1011, 1.0
    %v1013 = vrcp.pop %v1012
    %v1014 = vmul.f32 %v1012, %v1013
    %v1015 = vsub.f32 1.0, %v1014
    %v1016 = vmul.f32 %v1013, %v1015
    %v1017 = vadd.f32 %v1013, %v1016
    %vm1018 = vweird.f32 %v1012
    %vm1019 = vweird.f32 %v1013
    %vm1020 = vmor %vm1018, %vm1019
    %v1021 = vsel %vm1020, %v1013, %v1017
    %v1022 = vand.u32 2147483647, %v1012
    %vm1023 = vcmp.eq.f32.partialorder %v1022, 8.507059e+37
    %v1024 = vand.u32 %v1012, 2147483648
    %v1025 = vor.u32 1.1754944e-38, %v1024
    %v1026 = vsel %vm1023, %v1025, %v1021
    %v1027 = vmul.f32 1.0, %v1026
    %v1028 = vtanh.pop %v971
    %v1029 = vmul.f32 %v1027, %v891
    %1031 = vrot.lane.b32.xlu0 %v1028, 64
    %v1032 = vpop.permute.xlu0 %1031
    %v1034 = vmul.f32 %v1027, %v1032
    %1036 = vrot.lane.b32.xlu0 %v1034, 32
    %v1037 = vpop.permute.xlu0 %1036
    %v1039 = vadd.f32 %v1029, %v1037
    %v1040 = vtanh.pop %v1039
    %1042 = vrot.lane.b32.xlu0 %v1040, 64
    %v1043 = vpop.permute.xlu0 %1042
    %v1045 = vmul.f32 %v1027, %v1043
    %s1046 = scalar_lea.vmem [#allocation2], 56
    %v1047 = vld [vmem:[%s1046] sm:$0xff]
    %1049 = vrot.lane.b32.xlu0 %v1008, 32
    %v1050 = vpop.permute.xlu0 %1049
    %v1051 = vsel %vm161, %v1050, 0
    %1053 = vmatpush.msra.mxu0 0.0
    %1054 = vmatpush.msra.mxu0 0.0
    %1055 = vmatpush.msra.mxu0 0.0
    %1056 = vmatpush.msra.mxu0 0.0
    %1057 = vmatpush.msra.mxu0 0.0
    %1058 = vmatpush.msra.mxu0 0.0
    %1059 = vmatpush.msra.mxu0 0.0
    %1060 = vmatpush.msra.mxu0 0.0
    %1061 = vmatpush.msra.mxu0 0.0
    %1062 = vmatpush.msra.mxu0 0.0
    %1063 = vmatpush.msra.mxu0 0.0
    %1064 = vmatpush.msra.mxu0 0.0
    %1065 = vmatpush.msra.mxu0 %v108
    %1066 = vmatpush.msra.mxu0 %v107
    %1067 = vmatpush.msra.mxu0 %v106
    %1068 = vmatpush.msra.mxu0 %v105
    %1069 = vmatmul.f32.gmra.mxu0 %v1051
    %v1070 = vpop.f32.mrf.mxu0
    %v1071 = vadd.f32 0.0, %v1070
    %1072 = vdwg.mxu0
    %v1073 = vadd.f32 %v1047, %v1071
    %1075 = vrot.lane.b32.xlu0 %v1045, 32
    %v1076 = vpop.permute.xlu0 %1075
    %v1077 = vsel %vm161, %v1076, 0
    %1079 = vmatpush.msra.mxu0 0.0
    %1080 = vmatpush.msra.mxu0 0.0
    %1081 = vmatpush.msra.mxu0 0.0
    %1082 = vmatpush.msra.mxu0 0.0
    %1083 = vmatpush.msra.mxu0 0.0
    %1084 = vmatpush.msra.mxu0 0.0
    %1085 = vmatpush.msra.mxu0 0.0
    %1086 = vmatpush.msra.mxu0 0.0
    %1087 = vmatpush.msra.mxu0 0.0
    %1088 = vmatpush.msra.mxu0 0.0
    %1089 = vmatpush.msra.mxu0 0.0
    %1090 = vmatpush.msra.mxu0 0.0
    %1091 = vmatpush.msra.mxu0 %v116
    %1092 = vmatpush.msra.mxu0 %v115
    %1093 = vmatpush.msra.mxu0 %v114
    %1094 = vmatpush.msra.mxu0 %v113
    %1095 = vmatmul.f32.gmra.mxu0 %v1077
    %v1096 = vpop.f32.mrf.mxu0
    %v1097 = vadd.f32 0.0, %v1096
    %1098 = vdwg.mxu0
    %1099 = vmatpush.msra.mxu0 0.0
    %1100 = vmatpush.msra.mxu0 0.0
    %1101 = vmatpush.msra.mxu0 0.0
    %1102 = vmatpush.msra.mxu0 0.0
    %1103 = vmatpush.msra.mxu0 0.0
    %1104 = vmatpush.msra.mxu0 0.0
    %1105 = vmatpush.msra.mxu0 0.0
    %1106 = vmatpush.msra.mxu0 0.0
    %1107 = vmatpush.msra.mxu0 0.0
    %1108 = vmatpush.msra.mxu0 0.0
    %1109 = vmatpush.msra.mxu0 0.0
    %1110 = vmatpush.msra.mxu0 0.0
    %1111 = vmatpush.msra.mxu0 %v112
    %1112 = vmatpush.msra.mxu0 %v111
    %1113 = vmatpush.msra.mxu0 %v110
    %1114 = vmatpush.msra.mxu0 %v109
    %1115 = vmatmul.f32.gmra.mxu0 %v1051
    %v1116 = vpop.f32.mrf.mxu0
    %v1117 = vadd.f32 %v1097, %v1116
    %1118 = vdwg.mxu0
    %v1119 = vadd.f32 %v1117, %v229
    %v1120 = vxor.u32 %v1073, 2147483648
    %v1121 = vmul.f32 %v1120, 1.442695
    %v1122 = vpow.pop %v1121
    %v1123 = vadd.f32 %v1122, 1.0
    %v1124 = vrcp.pop %v1123
    %v1125 = vmul.f32 %v1123, %v1124
    %v1126 = vsub.f32 1.0, %v1125
    %v1127 = vmul.f32 %v1124, %v1126
    %v1128 = vadd.f32 %v1124, %v1127
    %vm1129 = vweird.f32 %v1123
    %vm1130 = vweird.f32 %v1124
    %vm1131 = vmor %vm1129, %vm1130
    %v1132 = vsel %vm1131, %v1124, %v1128
    %v1133 = vand.u32 2147483647, %v1123
    %vm1134 = vcmp.eq.f32.partialorder %v1133, 8.507059e+37
    %v1135 = vand.u32 %v1123, 2147483648
    %v1136 = vor.u32 1.1754944e-38, %v1135
    %v1137 = vsel %vm1134, %v1136, %v1132
    %v1138 = vmul.f32 1.0, %v1137
    %v1139 = vtanh.pop %v1073
    %v1140 = vmul.f32 %v1138, %v1002
    %1142 = vrot.lane.b32.xlu0 %v1139, 64
    %v1143 = vpop.permute.xlu0 %1142
    %v1145 = vmul.f32 %v1138, %v1143
    %1147 = vrot.lane.b32.xlu0 %v1145, 32
    %v1148 = vpop.permute.xlu0 %1147
    %v1150 = vadd.f32 %v1140, %v1148
    %v1151 = vtanh.pop %v1150
    %1153 = vrot.lane.b32.xlu0 %v1151, 64
    %v1154 = vpop.permute.xlu0 %1153
    %v1156 = vmul.f32 %v1138, %v1154
    %v1157 = vxor.u32 %v1119, 2147483648
    %v1158 = vmul.f32 %v1157, 1.442695
    %v1159 = vpow.pop %v1158
    %v1160 = vadd.f32 %v1159, 1.0
    %v1161 = vrcp.pop %v1160
    %v1162 = vmul.f32 %v1160, %v1161
    %v1163 = vsub.f32 1.0, %v1162
    %v1164 = vmul.f32 %v1161, %v1163
    %v1165 = vadd.f32 %v1161, %v1164
    %vm1166 = vweird.f32 %v1160
    %vm1167 = vweird.f32 %v1161
    %vm1168 = vmor %vm1166, %vm1167
    %v1169 = vsel %vm1168, %v1161, %v1165
    %v1170 = vand.u32 2147483647, %v1160
    %vm1171 = vcmp.eq.f32.partialorder %v1170, 8.507059e+37
    %v1172 = vand.u32 %v1160, 2147483648
    %v1173 = vor.u32 1.1754944e-38, %v1172
    %v1174 = vsel %vm1171, %v1173, %v1169
    %v1175 = vmul.f32 1.0, %v1174
    %v1176 = vtanh.pop %v1119
    %v1177 = vmul.f32 %v1175, %v1039
    %1179 = vrot.lane.b32.xlu0 %v1176, 64
    %v1180 = vpop.permute.xlu0 %1179
    %v1182 = vmul.f32 %v1175, %v1180
    %1184 = vrot.lane.b32.xlu0 %v1182, 32
    %v1185 = vpop.permute.xlu0 %1184
    %v1187 = vadd.f32 %v1177, %v1185
    %v1188 = vtanh.pop %v1187
    %1190 = vrot.lane.b32.xlu0 %v1188, 64
    %v1191 = vpop.permute.xlu0 %1190
    %v1193 = vmul.f32 %v1175, %v1191
    %1195 = vrot.lane.b32.xlu0 %v1193, 32
    %v1196 = vpop.permute.xlu0 %1195
    %v1197 = vsel %vm161, %v1196, 0
    %1199 = vmatpush.msra.mxu0 0.0
    %1200 = vmatpush.msra.mxu0 0.0
    %1201 = vmatpush.msra.mxu0 0.0
    %1202 = vmatpush.msra.mxu0 0.0
    %1203 = vmatpush.msra.mxu0 0.0
    %1204 = vmatpush.msra.mxu0 0.0
    %1205 = vmatpush.msra.mxu0 0.0
    %1206 = vmatpush.msra.mxu0 0.0
    %1207 = vmatpush.msra.mxu0 0.0
    %1208 = vmatpush.msra.mxu0 0.0
    %1209 = vmatpush.msra.mxu0 0.0
    %1210 = vmatpush.msra.mxu0 0.0
    %1211 = vmatpush.msra.mxu0 %v116
    %1212 = vmatpush.msra.mxu0 %v115
    %1213 = vmatpush.msra.mxu0 %v114
    %1214 = vmatpush.msra.mxu0 %v113
    %1215 = vmatmul.f32.gmra.mxu0 %v1197
    %v1216 = vpop.f32.mrf.mxu0
    %v1217 = vadd.f32 0.0, %v1216
    %1218 = vdwg.mxu0
    %1220 = vrot.lane.b32.xlu0 %v1156, 32
    %v1221 = vpop.permute.xlu0 %1220
    %v1222 = vsel %vm161, %v1221, 0
    %1224 = vmatpush.msra.mxu0 0.0
    %1225 = vmatpush.msra.mxu0 0.0
    %1226 = vmatpush.msra.mxu0 0.0
    %1227 = vmatpush.msra.mxu0 0.0
    %1228 = vmatpush.msra.mxu0 0.0
    %1229 = vmatpush.msra.mxu0 0.0
    %1230 = vmatpush.msra.mxu0 0.0
    %1231 = vmatpush.msra.mxu0 0.0
    %1232 = vmatpush.msra.mxu0 0.0
    %1233 = vmatpush.msra.mxu0 0.0
    %1234 = vmatpush.msra.mxu0 0.0
    %1235 = vmatpush.msra.mxu0 0.0
    %1236 = vmatpush.msra.mxu0 %v112
    %1237 = vmatpush.msra.mxu0 %v111
    %1238 = vmatpush.msra.mxu0 %v110
    %1239 = vmatpush.msra.mxu0 %v109
    %1240 = vmatmul.f32.gmra.mxu0 %v1222
    %v1241 = vpop.f32.mrf.mxu0
    %v1242 = vadd.f32 %v1217, %v1241
    %1243 = vdwg.mxu0
    %v1244 = vadd.f32 %v1242, %v229
    %v1245 = vxor.u32 %v1244, 2147483648
    %v1246 = vmul.f32 %v1245, 1.442695
    %v1247 = vpow.pop %v1246
    %v1248 = vadd.f32 %v1247, 1.0
    %v1249 = vrcp.pop %v1248
    %v1250 = vmul.f32 %v1248, %v1249
    %v1251 = vsub.f32 1.0, %v1250
    %v1252 = vmul.f32 %v1249, %v1251
    %v1253 = vadd.f32 %v1249, %v1252
    %vm1254 = vweird.f32 %v1248
    %vm1255 = vweird.f32 %v1249
    %vm1256 = vmor %vm1254, %vm1255
    %v1257 = vsel %vm1256, %v1249, %v1253
    %v1258 = vand.u32 2147483647, %v1248
    %vm1259 = vcmp.eq.f32.partialorder %v1258, 8.507059e+37
    %v1260 = vand.u32 %v1248, 2147483648
    %v1261 = vor.u32 1.1754944e-38, %v1260
    %v1262 = vsel %vm1259, %v1261, %v1257
    %v1263 = vmul.f32 1.0, %v1262
    %v1264 = vtanh.pop %v1244
    %v1265 = vmul.f32 %v1263, %v1187
    %1267 = vrot.lane.b32.xlu0 %v1264, 64
    %v1268 = vpop.permute.xlu0 %1267
    %v1270 = vmul.f32 %v1263, %v1268
    %1272 = vrot.lane.b32.xlu0 %v1270, 32
    %v1273 = vpop.permute.xlu0 %1272
    %v1275 = vadd.f32 %v1265, %v1273
    %v1276 = vtanh.pop %v1275
    %1278 = vrot.lane.b32.xlu0 %v1276, 64
    %v1279 = vpop.permute.xlu0 %1278
    %v1281 = vmul.f32 %v1263, %v1279
    %v1282 = vld [vmem:[#allocation10] sm:$0xff]
    %v1283 = vld [vmem:[#allocation10 + $0x8] sm:$0xff]
    %v1284 = vld [vmem:[#allocation10 + $0x10] sm:$0xff]
    %v1285 = vld [vmem:[#allocation10 + $0x18] sm:$0xff]
    %v1286 = vld [vmem:[%s6] sm:$0x1]
    %v1288 = vperm.slane %v1286, 0
    %1291 = vrot.lane.b32.xlu0 %v1281, 32
    %v1292 = vpop.permute.xlu0 %1291
    %v1293 = vsel %vm161, %v1292, 0
    %1295 = vmatpush.msra.mxu0 0.0
    %1296 = vmatpush.msra.mxu0 0.0
    %1297 = vmatpush.msra.mxu0 0.0
    %1298 = vmatpush.msra.mxu0 0.0
    %1299 = vmatpush.msra.mxu0 0.0
    %1300 = vmatpush.msra.mxu0 0.0
    %1301 = vmatpush.msra.mxu0 0.0
    %1302 = vmatpush.msra.mxu0 0.0
    %1303 = vmatpush.msra.mxu0 0.0
    %1304 = vmatpush.msra.mxu0 0.0
    %1305 = vmatpush.msra.mxu0 0.0
    %1306 = vmatpush.msra.mxu0 0.0
    %1307 = vmatpush.msra.mxu0 %v1285
    %1308 = vmatpush.msra.mxu0 %v1284
    %1309 = vmatpush.msra.mxu0 %v1283
    %1310 = vmatpush.msra.mxu0 %v1282
    %1311 = vmatmul.f32.gmra.mxu0 %v1293
    %v1312 = vpop.f32.mrf.mxu0
    %v1313 = vadd.f32 %v1288, %v1312
    %1314 = vdwg.mxu0
    %1315 = vst [vmem:[#allocation11] sm:$0xff] %v1313
    // Predicated region
    $region50: #{tpu_custom_call.1} parent=1 // pred_check
      _
    $region51: #{tpu_custom_call.1} parent=1 // pred_check_branch
      %1317 = sbr.rel (0) target = $region53
    $region52: #{tpu_custom_call.1} parent=1 // pred_region
      %1319 = vsyncadd [#allocation4], 0
      %s1321 = sshll.u32 [#allocation11], 4
      %s1322 = int_to_ptr.vmem [resolvable:$true] %s1321
      %s1323 = sshll.u32 %s7, 4
      %s1324 = int_to_ptr.hbm [resolvable:$true] %s1323
      %1326 = dma.vmem_to_hbm [thread:$0]  %s1322, 128, %s1324, [#allocation4]
    $region53: #{tpu_custom_call.1} parent=1 // pred_fallthru
      _
    // Predicated region
    $region54: #{tpu_custom_call.1} parent=1 // pred_check
      _
    $region55: #{tpu_custom_call.1} parent=1 // pred_check_branch
      %1328 = sbr.rel (0) target = $region57
    $region56: #{tpu_custom_call.1} parent=1 // pred_region
      %1330 = dma.done [#allocation4], 128
    $region57: #{tpu_custom_call.1} parent=1 // pred_fallthru
      _
    %1331 = vsyncpa [#allocation3], 1
    %1332 = vsyncpa [#allocation6], 1
    %1333 = vsyncpa [#allocation9], 1
    %1334 = vsyncpa [#allocation4], 1

</llo_original>
